<compile_context>
chip_gen: v7x
topology: tpu7x:2x2x1
jax: 0.10.0
libtpu: 0.0.40
codegen_flags: <defaults>
</compile_context>

<pallas_src>
import math

import jax
import jax.numpy as jnp
from jax.experimental import pallas as pl
from jax.experimental.pallas import tpu as pltpu

# ---------------- config (small synthetic shapes) ----------------
BATCH = 2
SEQ = 8
EMBED = 32
NUM_HEADS = 4
HEAD_DIM = EMBED // NUM_HEADS
DROPOUT_P = 0.1  # module arg; unused in forward (not applied)


def residual_block_forward(x, in_proj_w, in_proj_b, out_proj_w, out_proj_b,
                           num_heads, *, with_attn=True):
    """Pallas implementation of ResidualBlock.forward with layer=nn.MultiheadAttention.

    x: [N, S, E]  ->  (output [N, S, E], attn_weights [N, S, S] or None)
    """
    N, S, E = x.shape
    H = num_heads
    D = E // H
    scale = 1.0 / math.sqrt(D)

    # --- wrapper-side weight prep (per-head, right-multiply form) -------------
    # q/k/v = x @ W.T + b ; split W.T columns by head -> (H, E, D).
    def per_head(w):                                   # w: (E, E) rows = out feats
        return w.T.reshape(E, H, D).transpose(1, 0, 2)  # (H, E, D)

    # Fold the 1/sqrt(D) attention scale into the Q projection (weight AND bias).
    wq_h = (per_head(in_proj_w[:E]) * scale).astype(jnp.bfloat16)
    wk_h = per_head(in_proj_w[E:2 * E]).astype(jnp.bfloat16)
    wv_h = per_head(in_proj_w[2 * E:]).astype(jnp.bfloat16)
    bq_h = (in_proj_b[:E] * scale).reshape(H, 1, D).astype(jnp.float32)
    bk_h = in_proj_b[E:2 * E].reshape(H, 1, D).astype(jnp.float32)
    bv_h = in_proj_b[2 * E:].reshape(H, 1, D).astype(jnp.float32)
    # out = concat_h(ctx_h) @ Wout.T + bout  ==  sum_h ctx_h @ (Wout.T)[hD:(h+1)D, :]
    wo_h = out_proj_w.T.reshape(H, D, E).astype(jnp.bfloat16)   # (H, D, E)
    bo = out_proj_b.reshape(1, E).astype(jnp.float32)

    x_bf16 = x.astype(jnp.bfloat16)

    # --- kernel: whole batch in a single invocation ---------------------------
    def kernel(x_ref, wq_ref, wk_ref, wv_ref, bq_ref, bk_ref, bv_ref,
               wo_ref, bo_ref, *out_refs):
        if with_attn:
            out_ref, attn_ref = out_refs
        else:
            (out_ref,) = out_refs

        wq = wq_ref[...]                                    # (H, E, D) bf16
        wk = wk_ref[...]
        wv = wv_ref[...]
        wo = wo_ref[...]                                    # (H, D, E) bf16
        bq = bq_ref[...]                                    # (H, 1, D) f32
        bk = bk_ref[...]
        bv = bv_ref[...]
        bo_ = bo_ref[...]                                   # (1, E)   f32

        for n in range(N):  # static unroll; N is tiny
            xb = jnp.broadcast_to(x_ref[n], (H, S, E))      # (H, S, E) bf16

            # Head-batched projections on the MXU, f32 accumulation.
            q = jnp.einsum("hse,hed->hsd", xb, wq,
                           preferred_element_type=jnp.float32) + bq
            k = jnp.einsum("hse,hed->hsd", xb, wk,
                           preferred_element_type=jnp.float32) + bk
            v = jnp.einsum("hse,hed->hsd", xb, wv,
                           preferred_element_type=jnp.float32) + bv

            # Scaled dot-product attention; softmax elementwise math in f32.
            s = jnp.einsum("hqd,hkd->hqk", q.astype(jnp.bfloat16),
                           k.astype(jnp.bfloat16),
                           preferred_element_type=jnp.float32)   # (H, S, S)
            s = s - jnp.max(s, axis=-1, keepdims=True)
            p = jnp.exp(s)
            p = p * pl.reciprocal(jnp.sum(p, axis=-1, keepdims=True), approx=True)

            ctx = jnp.einsum("hqk,hkd->hqd", p.astype(jnp.bfloat16),
                             v.astype(jnp.bfloat16),
                             preferred_element_type=jnp.float32)  # (H, S, D)

            # Per-head out-projection summed over heads (== concat + one matmul).
            o = jnp.einsum("hsd,hde->hse", ctx.astype(jnp.bfloat16), wo,
                           preferred_element_type=jnp.float32)    # (H, S, E)
            out_ref[n] = (jnp.sum(o, axis=0) + bo_).astype(out_ref.dtype)

            if with_attn:
                attn_ref[n] = jnp.mean(p, axis=0).astype(attn_ref.dtype)

    out_shapes = [jax.ShapeDtypeStruct((N, S, E), jnp.float32)]
    if with_attn:
        out_shapes.append(jax.ShapeDtypeStruct((N, S, S), jnp.float32))

    vmem = pl.BlockSpec(memory_space=pltpu.MemorySpace.VMEM)
    results = pl.pallas_call(
        kernel,
        out_shape=tuple(out_shapes),
        in_specs=[vmem] * 9,
        out_specs=tuple([vmem] * len(out_shapes)),
    )(x_bf16, wq_h, wk_h, wv_h, bq_h, bk_h, bv_h, wo_h, bo)

    if with_attn:
        return results
    return results[0], None


# ---------------- pure-JAX f32 reference (correctness check) ----------------
def reference_forward(x, in_proj_w, in_proj_b, out_proj_w, out_proj_b, num_heads):
    N, S, E = x.shape
    H = num_heads
    D = E // H
    qkv = jnp.einsum("nse,fe->nsf", x, in_proj_w) + in_proj_b
    q, k, v = qkv[..., :E], qkv[..., E:2 * E], qkv[..., 2 * E:]

    def split_heads(t):  # [N,S,E] -> [N,H,S,D]
        return t.reshape(N, S, H, D).transpose(0, 2, 1, 3)

    qh, kh, vh = split_heads(q), split_heads(k), split_heads(v)
    s = jnp.einsum("nhqd,nhkd->nhqk", qh, kh) / math.sqrt(D)
    p = jax.nn.softmax(s, axis=-1)
    ctx = jnp.einsum("nhqk,nhkd->nhqd", p, vh)
    ctx = ctx.transpose(0, 2, 1, 3).reshape(N, S, E)
    out = jnp.einsum("nse,fe->nsf", ctx, out_proj_w) + out_proj_b
    return out, jnp.mean(p, axis=1)


if __name__ == "__main__":
    key = jax.random.PRNGKey(0)
    kx, k1, k2, k3, k4 = jax.random.split(key, 5)

    # synthetic parameters matching nn.MultiheadAttention(EMBED, NUM_HEADS)
    x = jax.random.normal(kx, (BATCH, SEQ, EMBED), dtype=jnp.float32)
    in_proj_w = 0.1 * jax.random.normal(k1, (3 * EMBED, EMBED), dtype=jnp.float32)
    in_proj_b = 0.1 * jax.random.normal(k2, (3 * EMBED,), dtype=jnp.float32)
    out_proj_w = 0.1 * jax.random.normal(k3, (EMBED, EMBED), dtype=jnp.float32)
    out_proj_b = 0.1 * jax.random.normal(k4, (EMBED,), dtype=jnp.float32)

    out, attn = residual_block_forward(x, in_proj_w, in_proj_b, out_proj_w,
                                       out_proj_b, NUM_HEADS, with_attn=True)
    out = jax.block_until_ready(out)
    attn = jax.block_until_ready(attn)

    ref_out, ref_attn = reference_forward(x, in_proj_w, in_proj_b, out_proj_w,
                                          out_proj_b, NUM_HEADS)
    assert out.shape == (BATCH, SEQ, EMBED) and attn.shape == (BATCH, SEQ, SEQ)
    # bf16 matmul operands + approx reciprocal -> ~1e-2 level deviation vs f32 ref.
    assert jnp.allclose(out, ref_out, atol=3e-2, rtol=3e-2)
    assert jnp.allclose(attn, ref_attn, atol=1e-2, rtol=1e-2)

    print("KERNEL_OK")
</pallas_src>

<mosaic_0001>
module attributes {stable_mosaic.version = 11 : i64} {
  func.func @kernel(%arg0: memref<2x8x32xbf16, #tpu.memory_space<vmem>>, %arg1: memref<4x32x8xbf16, #tpu.memory_space<vmem>>, %arg2: memref<4x32x8xbf16, #tpu.memory_space<vmem>>, %arg3: memref<4x32x8xbf16, #tpu.memory_space<vmem>>, %arg4: memref<4x1x8xf32, #tpu.memory_space<vmem>>, %arg5: memref<4x1x8xf32, #tpu.memory_space<vmem>>, %arg6: memref<4x1x8xf32, #tpu.memory_space<vmem>>, %arg7: memref<4x8x32xbf16, #tpu.memory_space<vmem>>, %arg8: memref<1x32xf32, #tpu.memory_space<vmem>>, %arg9: memref<2x8x32xf32, #tpu.memory_space<vmem>>, %arg10: memref<2x8x8xf32, #tpu.memory_space<vmem>>) attributes {dimension_semantics = [], scalar_prefetch = 0 : i64, scratch_operands = 0 : i64, tpu.core_type = #tpu.core_type<tc>} {
    %c0 = arith.constant 0 : index
    %c0_0 = arith.constant 0 : index
    %c0_1 = arith.constant 0 : index
    %0 = vector.load %arg1[%c0, %c0_0, %c0_1] : memref<4x32x8xbf16, #tpu.memory_space<vmem>>, vector<4x32x8xbf16>
    %c0_2 = arith.constant 0 : index
    %c0_3 = arith.constant 0 : index
    %c0_4 = arith.constant 0 : index
    %1 = vector.load %arg2[%c0_2, %c0_3, %c0_4] : memref<4x32x8xbf16, #tpu.memory_space<vmem>>, vector<4x32x8xbf16>
    %c0_5 = arith.constant 0 : index
    %c0_6 = arith.constant 0 : index
    %c0_7 = arith.constant 0 : index
    %2 = vector.load %arg3[%c0_5, %c0_6, %c0_7] : memref<4x32x8xbf16, #tpu.memory_space<vmem>>, vector<4x32x8xbf16>
    %c0_8 = arith.constant 0 : index
    %c0_9 = arith.constant 0 : index
    %c0_10 = arith.constant 0 : index
    %3 = vector.load %arg7[%c0_8, %c0_9, %c0_10] : memref<4x8x32xbf16, #tpu.memory_space<vmem>>, vector<4x8x32xbf16>
    %c0_11 = arith.constant 0 : index
    %c0_12 = arith.constant 0 : index
    %c0_13 = arith.constant 0 : index
    %4 = vector.load %arg4[%c0_11, %c0_12, %c0_13] : memref<4x1x8xf32, #tpu.memory_space<vmem>>, vector<4x1x8xf32>
    %c0_14 = arith.constant 0 : index
    %c0_15 = arith.constant 0 : index
    %c0_16 = arith.constant 0 : index
    %5 = vector.load %arg5[%c0_14, %c0_15, %c0_16] : memref<4x1x8xf32, #tpu.memory_space<vmem>>, vector<4x1x8xf32>
    %c0_17 = arith.constant 0 : index
    %c0_18 = arith.constant 0 : index
    %c0_19 = arith.constant 0 : index
    %6 = vector.load %arg6[%c0_17, %c0_18, %c0_19] : memref<4x1x8xf32, #tpu.memory_space<vmem>>, vector<4x1x8xf32>
    %c0_20 = arith.constant 0 : index
    %c0_21 = arith.constant 0 : index
    %7 = vector.load %arg8[%c0_20, %c0_21] : memref<1x32xf32, #tpu.memory_space<vmem>>, vector<1x32xf32>
    %c0_22 = arith.constant 0 : index
    %c0_23 = arith.constant 0 : index
    %c0_24 = arith.constant 0 : index
    %8 = vector.load %arg0[%c0_22, %c0_23, %c0_24] : memref<2x8x32xbf16, #tpu.memory_space<vmem>>, vector<1x8x32xbf16>
    %9 = vector.shape_cast %8 : vector<1x8x32xbf16> to vector<8x32xbf16>
    %10 = vector.shape_cast %9 : vector<8x32xbf16> to vector<1x8x32xbf16>
    %11 = vector.broadcast %10 : vector<1x8x32xbf16> to vector<4x8x32xbf16>
    "tpu.trace_start"() <{level = 10 : i32, message = "hse,hed->hsd"}> : () -> ()
    %cst = arith.constant dense<0.000000e+00> : vector<4x8x8xf32>
    %12 = tpu.matmul %11, %0, %cst {dimension_numbers = #tpu.dot_dimension_numbers<[2], [1], [1], [2], [0, 0, 0, 1, 1, 2], [0], [0]>} : vector<4x8x32xbf16>, vector<4x32x8xbf16>, vector<4x8x8xf32> -> vector<4x8x8xf32>
    "tpu.trace_stop"() : () -> ()
    %13 = vector.broadcast %4 : vector<4x1x8xf32> to vector<4x8x8xf32>
    %14 = arith.addf %12, %13 : vector<4x8x8xf32>
    "tpu.trace_start"() <{level = 10 : i32, message = "hse,hed->hsd"}> : () -> ()
    %cst_25 = arith.constant dense<0.000000e+00> : vector<4x8x8xf32>
    %15 = tpu.matmul %11, %1, %cst_25 {dimension_numbers = #tpu.dot_dimension_numbers<[2], [1], [1], [2], [0, 0, 0, 1, 1, 2], [0], [0]>} : vector<4x8x32xbf16>, vector<4x32x8xbf16>, vector<4x8x8xf32> -> vector<4x8x8xf32>
    "tpu.trace_stop"() : () -> ()
    %16 = vector.broadcast %5 : vector<4x1x8xf32> to vector<4x8x8xf32>
    %17 = arith.addf %15, %16 : vector<4x8x8xf32>
    "tpu.trace_start"() <{level = 10 : i32, message = "hse,hed->hsd"}> : () -> ()
    %cst_26 = arith.constant dense<0.000000e+00> : vector<4x8x8xf32>
    %18 = tpu.matmul %11, %2, %cst_26 {dimension_numbers = #tpu.dot_dimension_numbers<[2], [1], [1], [2], [0, 0, 0, 1, 1, 2], [0], [0]>} : vector<4x8x32xbf16>, vector<4x32x8xbf16>, vector<4x8x8xf32> -> vector<4x8x8xf32>
    "tpu.trace_stop"() : () -> ()
    %19 = vector.broadcast %6 : vector<4x1x8xf32> to vector<4x8x8xf32>
    %20 = arith.addf %18, %19 : vector<4x8x8xf32>
    %21 = arith.truncf %14 : vector<4x8x8xf32> to vector<4x8x8xbf16>
    %22 = arith.truncf %17 : vector<4x8x8xf32> to vector<4x8x8xbf16>
    "tpu.trace_start"() <{level = 10 : i32, message = "hqd,hkd->hqk"}> : () -> ()
    %cst_27 = arith.constant dense<0.000000e+00> : vector<4x8x8xf32>
    %23 = tpu.matmul %21, %22, %cst_27 {dimension_numbers = #tpu.dot_dimension_numbers<[2], [2], [1], [1], [0, 0, 0, 1, 1, 1], [0], [0]>} : vector<4x8x8xbf16>, vector<4x8x8xbf16>, vector<4x8x8xf32> -> vector<4x8x8xf32>
    "tpu.trace_stop"() : () -> ()
    %cst_28 = arith.constant dense<0xFF800000> : vector<4x8xf32>
    %24 = vector.multi_reduction <maximumf>, %23, %cst_28 [2] : vector<4x8x8xf32> to vector<4x8xf32>
    %25 = vector.shape_cast %24 : vector<4x8xf32> to vector<4x8x1xf32>
    %26 = vector.broadcast %25 : vector<4x8x1xf32> to vector<4x8x8xf32>
    %27 = arith.subf %23, %26 : vector<4x8x8xf32>
    %28 = math.exp %27 : vector<4x8x8xf32>
    %cst_29 = arith.constant dense<0.000000e+00> : vector<4x8xf32>
    %29 = vector.multi_reduction <add>, %28, %cst_29 [2] : vector<4x8x8xf32> to vector<4x8xf32>
    %30 = vector.shape_cast %29 : vector<4x8xf32> to vector<4x8x1xf32>
    %31 = tpu.reciprocal %30 {approx = true} : vector<4x8x1xf32> -> vector<4x8x1xf32>
    %32 = vector.broadcast %31 : vector<4x8x1xf32> to vector<4x8x8xf32>
    %33 = arith.mulf %28, %32 : vector<4x8x8xf32>
    %34 = arith.truncf %33 : vector<4x8x8xf32> to vector<4x8x8xbf16>
    %35 = arith.truncf %20 : vector<4x8x8xf32> to vector<4x8x8xbf16>
    "tpu.trace_start"() <{level = 10 : i32, message = "hqk,hkd->hqd"}> : () -> ()
    %cst_30 = arith.constant dense<0.000000e+00> : vector<4x8x8xf32>
    %36 = tpu.matmul %34, %35, %cst_30 {dimension_numbers = #tpu.dot_dimension_numbers<[2], [1], [1], [2], [0, 0, 0, 1, 1, 2], [0], [0]>} : vector<4x8x8xbf16>, vector<4x8x8xbf16>, vector<4x8x8xf32> -> vector<4x8x8xf32>
    "tpu.trace_stop"() : () -> ()
    %37 = arith.truncf %36 : vector<4x8x8xf32> to vector<4x8x8xbf16>
    "tpu.trace_start"() <{level = 10 : i32, message = "hsd,hde->hse"}> : () -> ()
    %cst_31 = arith.constant dense<0.000000e+00> : vector<4x8x32xf32>
    %38 = tpu.matmul %37, %3, %cst_31 {dimension_numbers = #tpu.dot_dimension_numbers<[2], [1], [1], [2], [0, 0, 0, 1, 1, 2], [0], [0]>} : vector<4x8x8xbf16>, vector<4x8x32xbf16>, vector<4x8x32xf32> -> vector<4x8x32xf32>
    "tpu.trace_stop"() : () -> ()
    %cst_32 = arith.constant dense<0.000000e+00> : vector<8x32xf32>
    %39 = vector.multi_reduction <add>, %38, %cst_32 [0] : vector<4x8x32xf32> to vector<8x32xf32>
    %40 = vector.broadcast %7 : vector<1x32xf32> to vector<8x32xf32>
    %41 = arith.addf %39, %40 : vector<8x32xf32>
    %c0_33 = arith.constant 0 : index
    %c0_34 = arith.constant 0 : index
    %c0_35 = arith.constant 0 : index
    %42 = vector.load %arg9[%c0_33, %c0_34, %c0_35] : memref<2x8x32xf32, #tpu.memory_space<vmem>>, vector<1x8x32xf32>
    %43 = vector.shape_cast %42 : vector<1x8x32xf32> to vector<8x32xf32>
    %44 = vector.shape_cast %41 : vector<8x32xf32> to vector<1x8x32xf32>
    tpu.vector_store %arg9[%c0_33, %c0_34, %c0_35], %44 {strides = array<i32>} : memref<2x8x32xf32, #tpu.memory_space<vmem>>, vector<1x8x32xf32>,
    %cst_36 = arith.constant dense<0.000000e+00> : vector<8x8xf32>
    %45 = vector.multi_reduction <add>, %33, %cst_36 [0] : vector<4x8x8xf32> to vector<8x8xf32>
    %cst_37 = arith.constant 4.000000e+00 : f32
    %46 = vector.broadcast %cst_37 : f32 to vector<8x8xf32>
    %47 = arith.divf %45, %46 : vector<8x8xf32>
    %c0_38 = arith.constant 0 : index
    %c0_39 = arith.constant 0 : index
    %c0_40 = arith.constant 0 : index
    %48 = vector.load %arg10[%c0_38, %c0_39, %c0_40] : memref<2x8x8xf32, #tpu.memory_space<vmem>>, vector<1x8x8xf32>
    %49 = vector.shape_cast %48 : vector<1x8x8xf32> to vector<8x8xf32>
    %50 = vector.shape_cast %47 : vector<8x8xf32> to vector<1x8x8xf32>
    tpu.vector_store %arg10[%c0_38, %c0_39, %c0_40], %50 {strides = array<i32>} : memref<2x8x8xf32, #tpu.memory_space<vmem>>, vector<1x8x8xf32>,
    %c1 = arith.constant 1 : index
    %c0_41 = arith.constant 0 : index
    %c0_42 = arith.constant 0 : index
    %51 = vector.load %arg0[%c1, %c0_41, %c0_42] : memref<2x8x32xbf16, #tpu.memory_space<vmem>>, vector<1x8x32xbf16>
    %52 = vector.shape_cast %51 : vector<1x8x32xbf16> to vector<8x32xbf16>
    %53 = vector.shape_cast %52 : vector<8x32xbf16> to vector<1x8x32xbf16>
    %54 = vector.broadcast %53 : vector<1x8x32xbf16> to vector<4x8x32xbf16>
    "tpu.trace_start"() <{level = 10 : i32, message = "hse,hed->hsd"}> : () -> ()
    %cst_43 = arith.constant dense<0.000000e+00> : vector<4x8x8xf32>
    %55 = tpu.matmul %54, %0, %cst_43 {dimension_numbers = #tpu.dot_dimension_numbers<[2], [1], [1], [2], [0, 0, 0, 1, 1, 2], [0], [0]>} : vector<4x8x32xbf16>, vector<4x32x8xbf16>, vector<4x8x8xf32> -> vector<4x8x8xf32>
    "tpu.trace_stop"() : () -> ()
    %56 = vector.broadcast %4 : vector<4x1x8xf32> to vector<4x8x8xf32>
    %57 = arith.addf %55, %56 : vector<4x8x8xf32>
    "tpu.trace_start"() <{level = 10 : i32, message = "hse,hed->hsd"}> : () -> ()
    %cst_44 = arith.constant dense<0.000000e+00> : vector<4x8x8xf32>
    %58 = tpu.matmul %54, %1, %cst_44 {dimension_numbers = #tpu.dot_dimension_numbers<[2], [1], [1], [2], [0, 0, 0, 1, 1, 2], [0], [0]>} : vector<4x8x32xbf16>, vector<4x32x8xbf16>, vector<4x8x8xf32> -> vector<4x8x8xf32>
    "tpu.trace_stop"() : () -> ()
    %59 = vector.broadcast %5 : vector<4x1x8xf32> to vector<4x8x8xf32>
    %60 = arith.addf %58, %59 : vector<4x8x8xf32>
    "tpu.trace_start"() <{level = 10 : i32, message = "hse,hed->hsd"}> : () -> ()
    %cst_45 = arith.constant dense<0.000000e+00> : vector<4x8x8xf32>
    %61 = tpu.matmul %54, %2, %cst_45 {dimension_numbers = #tpu.dot_dimension_numbers<[2], [1], [1], [2], [0, 0, 0, 1, 1, 2], [0], [0]>} : vector<4x8x32xbf16>, vector<4x32x8xbf16>, vector<4x8x8xf32> -> vector<4x8x8xf32>
    "tpu.trace_stop"() : () -> ()
    %62 = vector.broadcast %6 : vector<4x1x8xf32> to vector<4x8x8xf32>
    %63 = arith.addf %61, %62 : vector<4x8x8xf32>
    %64 = arith.truncf %57 : vector<4x8x8xf32> to vector<4x8x8xbf16>
    %65 = arith.truncf %60 : vector<4x8x8xf32> to vector<4x8x8xbf16>
    "tpu.trace_start"() <{level = 10 : i32, message = "hqd,hkd->hqk"}> : () -> ()
    %cst_46 = arith.constant dense<0.000000e+00> : vector<4x8x8xf32>
    %66 = tpu.matmul %64, %65, %cst_46 {dimension_numbers = #tpu.dot_dimension_numbers<[2], [2], [1], [1], [0, 0, 0, 1, 1, 1], [0], [0]>} : vector<4x8x8xbf16>, vector<4x8x8xbf16>, vector<4x8x8xf32> -> vector<4x8x8xf32>
    "tpu.trace_stop"() : () -> ()
    %cst_47 = arith.constant dense<0xFF800000> : vector<4x8xf32>
    %67 = vector.multi_reduction <maximumf>, %66, %cst_47 [2] : vector<4x8x8xf32> to vector<4x8xf32>
    %68 = vector.shape_cast %67 : vector<4x8xf32> to vector<4x8x1xf32>
    %69 = vector.broadcast %68 : vector<4x8x1xf32> to vector<4x8x8xf32>
    %70 = arith.subf %66, %69 : vector<4x8x8xf32>
    %71 = math.exp %70 : vector<4x8x8xf32>
    %cst_48 = arith.constant dense<0.000000e+00> : vector<4x8xf32>
    %72 = vector.multi_reduction <add>, %71, %cst_48 [2] : vector<4x8x8xf32> to vector<4x8xf32>
    %73 = vector.shape_cast %72 : vector<4x8xf32> to vector<4x8x1xf32>
    %74 = tpu.reciprocal %73 {approx = true} : vector<4x8x1xf32> -> vector<4x8x1xf32>
    %75 = vector.broadcast %74 : vector<4x8x1xf32> to vector<4x8x8xf32>
    %76 = arith.mulf %71, %75 : vector<4x8x8xf32>
    %77 = arith.truncf %76 : vector<4x8x8xf32> to vector<4x8x8xbf16>
    %78 = arith.truncf %63 : vector<4x8x8xf32> to vector<4x8x8xbf16>
    "tpu.trace_start"() <{level = 10 : i32, message = "hqk,hkd->hqd"}> : () -> ()
    %cst_49 = arith.constant dense<0.000000e+00> : vector<4x8x8xf32>
    %79 = tpu.matmul %77, %78, %cst_49 {dimension_numbers = #tpu.dot_dimension_numbers<[2], [1], [1], [2], [0, 0, 0, 1, 1, 2], [0], [0]>} : vector<4x8x8xbf16>, vector<4x8x8xbf16>, vector<4x8x8xf32> -> vector<4x8x8xf32>
    "tpu.trace_stop"() : () -> ()
    %80 = arith.truncf %79 : vector<4x8x8xf32> to vector<4x8x8xbf16>
    "tpu.trace_start"() <{level = 10 : i32, message = "hsd,hde->hse"}> : () -> ()
    %cst_50 = arith.constant dense<0.000000e+00> : vector<4x8x32xf32>
    %81 = tpu.matmul %80, %3, %cst_50 {dimension_numbers = #tpu.dot_dimension_numbers<[2], [1], [1], [2], [0, 0, 0, 1, 1, 2], [0], [0]>} : vector<4x8x8xbf16>, vector<4x8x32xbf16>, vector<4x8x32xf32> -> vector<4x8x32xf32>
    "tpu.trace_stop"() : () -> ()
    %cst_51 = arith.constant dense<0.000000e+00> : vector<8x32xf32>
    %82 = vector.multi_reduction <add>, %81, %cst_51 [0] : vector<4x8x32xf32> to vector<8x32xf32>
    %83 = vector.broadcast %7 : vector<1x32xf32> to vector<8x32xf32>
    %84 = arith.addf %82, %83 : vector<8x32xf32>
    %c1_52 = arith.constant 1 : index
    %c0_53 = arith.constant 0 : index
    %c0_54 = arith.constant 0 : index
    %85 = vector.load %arg9[%c1_52, %c0_53, %c0_54] : memref<2x8x32xf32, #tpu.memory_space<vmem>>, vector<1x8x32xf32>
    %86 = vector.shape_cast %85 : vector<1x8x32xf32> to vector<8x32xf32>
    %87 = vector.shape_cast %84 : vector<8x32xf32> to vector<1x8x32xf32>
    tpu.vector_store %arg9[%c1_52, %c0_53, %c0_54], %87 {strides = array<i32>} : memref<2x8x32xf32, #tpu.memory_space<vmem>>, vector<1x8x32xf32>,
    %cst_55 = arith.constant dense<0.000000e+00> : vector<8x8xf32>
    %88 = vector.multi_reduction <add>, %76, %cst_55 [0] : vector<4x8x8xf32> to vector<8x8xf32>
    %cst_56 = arith.constant 4.000000e+00 : f32
    %89 = vector.broadcast %cst_56 : f32 to vector<8x8xf32>
    %90 = arith.divf %88, %89 : vector<8x8xf32>
    %c1_57 = arith.constant 1 : index
    %c0_58 = arith.constant 0 : index
    %c0_59 = arith.constant 0 : index
    %91 = vector.load %arg10[%c1_57, %c0_58, %c0_59] : memref<2x8x8xf32, #tpu.memory_space<vmem>>, vector<1x8x8xf32>
    %92 = vector.shape_cast %91 : vector<1x8x8xf32> to vector<8x8xf32>
    %93 = vector.shape_cast %90 : vector<8x8xf32> to vector<1x8x8xf32>
    tpu.vector_store %arg10[%c1_57, %c0_58, %c0_59], %93 {strides = array<i32>} : memref<2x8x8xf32, #tpu.memory_space<vmem>>, vector<1x8x8xf32>,
    return
  }
}

</mosaic_0001>

<llo_original>
// kernel: tpu_custom_call.1
$region0: #{tpu_custom_call.1}
  #allocation0 [shape = 'u32[]', space=smem, size = 0x4, offset = 0x4, fixed_abs, tag = 'smem constant byte address 0x4 - core index']
  #allocation1 [shape = 'u32[144,128]{1,0:T(1,128)}', space=vmem, size = 0x12000, scoped, tag = 'internal scratch']
  %s0 = inlined_call_operand.vmem [shape: bf16[2,8,32], index: 0, kind: input, shape index: {}]
  %s1 = inlined_call_operand.vmem [shape: bf16[4,32,8], index: 1, kind: input, shape index: {}]
  %s2 = inlined_call_operand.vmem [shape: bf16[4,32,8], index: 2, kind: input, shape index: {}]
  %s3 = inlined_call_operand.vmem [shape: bf16[4,32,8], index: 3, kind: input, shape index: {}]
  %s4 = inlined_call_operand.vmem [shape: f32[4,1,8], index: 4, kind: input, shape index: {}]
  %s5 = inlined_call_operand.vmem [shape: f32[4,1,8], index: 5, kind: input, shape index: {}]
  %s6 = inlined_call_operand.vmem [shape: f32[4,1,8], index: 6, kind: input, shape index: {}]
  %s7 = inlined_call_operand.vmem [shape: bf16[4,8,32], index: 7, kind: input, shape index: {}]
  %s8 = inlined_call_operand.vmem [shape: f32[1,32], index: 8, kind: input, shape index: {}]
  %s9 = inlined_call_operand.hbm [shape: f32[2,8,32], index: 9, kind: output, shape index: {0}]
  %s10 = inlined_call_operand.hbm [shape: f32[2,8,8], index: 10, kind: output, shape index: {1}]
  %11 = xla_tuple %s9, %s10
  %s12 = sld [smem:[#allocation0]]
  $region54: #{tpu_custom_call.1} parent=0
    _
  %s14 = ssub.s32 1, %s12
  %s15 = scalar_select 0, %s14, %s12
  $region1: #{tpu_custom_call.1} parent=0
    #allocation2 [shape = 'u8[8192]{0}', space=vmem, size = 0x2000, scoped, tag = 'output window, operand 0, single buffered']
    #allocation3 [shape = 's32[1]{0}', space=sflag, size = 0x4, scoped, tag = 'scoped memory for tpu_custom_call.1']
    #allocation4 [shape = 'u8[8192]{0}', space=vmem, size = 0x2000, scoped, tag = 'output window, operand 1, single buffered']
    #allocation5 [shape = 's32[1]{0}', space=sflag, size = 0x4, scoped, tag = 'scoped memory for tpu_custom_call.1']
    %16 = vsyncpa [#allocation3], 0
    %17 = vsyncpa [#allocation5], 0
    // Predicated region
    $region2: #{tpu_custom_call.1} parent=1 // pred_check
      _
    $region3: #{tpu_custom_call.1} parent=1 // pred_check_branch
      %19 = sbr.rel (0) target = $region5
    $region4: #{tpu_custom_call.1} parent=1 // pred_region
      _
    $region5: #{tpu_custom_call.1} parent=1 // pred_fallthru
      _
    // Predicated region
    $region6: #{tpu_custom_call.1} parent=1 // pred_check
      _
    $region7: #{tpu_custom_call.1} parent=1 // pred_check_branch
      %21 = sbr.rel (0) target = $region9
    $region8: #{tpu_custom_call.1} parent=1 // pred_region
      _
    $region9: #{tpu_custom_call.1} parent=1 // pred_fallthru
      _
    // Predicated region
    $region10: #{tpu_custom_call.1} parent=1 // pred_check
      _
    $region11: #{tpu_custom_call.1} parent=1 // pred_check_branch
      %23 = sbr.rel (0) target = $region13
    $region12: #{tpu_custom_call.1} parent=1 // pred_region
      _
    $region13: #{tpu_custom_call.1} parent=1 // pred_fallthru
      _
    // Predicated region
    $region14: #{tpu_custom_call.1} parent=1 // pred_check
      _
    $region15: #{tpu_custom_call.1} parent=1 // pred_check_branch
      %25 = sbr.rel (0) target = $region17
    $region16: #{tpu_custom_call.1} parent=1 // pred_region
      _
    $region17: #{tpu_custom_call.1} parent=1 // pred_fallthru
      _
    // Predicated region
    $region18: #{tpu_custom_call.1} parent=1 // pred_check
      _
    $region19: #{tpu_custom_call.1} parent=1 // pred_check_branch
      %27 = sbr.rel (0) target = $region21
    $region20: #{tpu_custom_call.1} parent=1 // pred_region
      _
    $region21: #{tpu_custom_call.1} parent=1 // pred_fallthru
      _
    // Predicated region
    $region22: #{tpu_custom_call.1} parent=1 // pred_check
      _
    $region23: #{tpu_custom_call.1} parent=1 // pred_check_branch
      %29 = sbr.rel (0) target = $region25
    $region24: #{tpu_custom_call.1} parent=1 // pred_region
      _
    $region25: #{tpu_custom_call.1} parent=1 // pred_fallthru
      _
    // Predicated region
    $region26: #{tpu_custom_call.1} parent=1 // pred_check
      _
    $region27: #{tpu_custom_call.1} parent=1 // pred_check_branch
      %31 = sbr.rel (0) target = $region29
    $region28: #{tpu_custom_call.1} parent=1 // pred_region
      _
    $region29: #{tpu_custom_call.1} parent=1 // pred_fallthru
      _
    // Predicated region
    $region30: #{tpu_custom_call.1} parent=1 // pred_check
      _
    $region31: #{tpu_custom_call.1} parent=1 // pred_check_branch
      %33 = sbr.rel (0) target = $region33
    $region32: #{tpu_custom_call.1} parent=1 // pred_region
      _
    $region33: #{tpu_custom_call.1} parent=1 // pred_fallthru
      _
    // Predicated region
    $region34: #{tpu_custom_call.1} parent=1 // pred_check
      _
    $region35: #{tpu_custom_call.1} parent=1 // pred_check_branch
      %35 = sbr.rel (0) target = $region37
    $region36: #{tpu_custom_call.1} parent=1 // pred_region
      _
    $region37: #{tpu_custom_call.1} parent=1 // pred_fallthru
      _
    %v37 = vld [vmem:[%s1] sm:$0xf]
    %v38 = vld [vmem:[%s1 + $0x4] sm:$0xf]
    %v39 = vld [vmem:[%s1 + $0x8] sm:$0xf]
    %v40 = vld [vmem:[%s1 + $0xc] sm:$0xf]
    %v41 = vld [vmem:[%s1 + $0x10] sm:$0xf]
    %v42 = vld [vmem:[%s1 + $0x14] sm:$0xf]
    %v43 = vld [vmem:[%s1 + $0x18] sm:$0xf]
    %v44 = vld [vmem:[%s1 + $0x1c] sm:$0xf]
    %v45 = vld [vmem:[%s1 + $0x20] sm:$0xf]
    %v46 = vld [vmem:[%s1 + $0x24] sm:$0xf]
    %v47 = vld [vmem:[%s1 + $0x28] sm:$0xf]
    %v48 = vld [vmem:[%s1 + $0x2c] sm:$0xf]
    %v49 = vld [vmem:[%s1 + $0x30] sm:$0xf]
    %v50 = vld [vmem:[%s1 + $0x34] sm:$0xf]
    %v51 = vld [vmem:[%s1 + $0x38] sm:$0xf]
    %v52 = vld [vmem:[%s1 + $0x3c] sm:$0xf]
    %v53 = vld [vmem:[%s2] sm:$0xf]
    %v54 = vld [vmem:[%s2 + $0x4] sm:$0xf]
    %v55 = vld [vmem:[%s2 + $0x8] sm:$0xf]
    %v56 = vld [vmem:[%s2 + $0xc] sm:$0xf]
    %v57 = vld [vmem:[%s2 + $0x10] sm:$0xf]
    %v58 = vld [vmem:[%s2 + $0x14] sm:$0xf]
    %v59 = vld [vmem:[%s2 + $0x18] sm:$0xf]
    %v60 = vld [vmem:[%s2 + $0x1c] sm:$0xf]
    %v61 = vld [vmem:[%s2 + $0x20] sm:$0xf]
    %v62 = vld [vmem:[%s2 + $0x24] sm:$0xf]
    %v63 = vld [vmem:[%s2 + $0x28] sm:$0xf]
    %v64 = vld [vmem:[%s2 + $0x2c] sm:$0xf]
    %v65 = vld [vmem:[%s2 + $0x30] sm:$0xf]
    %v66 = vld [vmem:[%s2 + $0x34] sm:$0xf]
    %v67 = vld [vmem:[%s2 + $0x38] sm:$0xf]
    %v68 = vld [vmem:[%s2 + $0x3c] sm:$0xf]
    %v69 = vld [vmem:[%s3] sm:$0xf]
    %v70 = vld [vmem:[%s3 + $0x4] sm:$0xf]
    %v71 = vld [vmem:[%s3 + $0x8] sm:$0xf]
    %v72 = vld [vmem:[%s3 + $0xc] sm:$0xf]
    %v73 = vld [vmem:[%s3 + $0x10] sm:$0xf]
    %v74 = vld [vmem:[%s3 + $0x14] sm:$0xf]
    %v75 = vld [vmem:[%s3 + $0x18] sm:$0xf]
    %v76 = vld [vmem:[%s3 + $0x1c] sm:$0xf]
    %v77 = vld [vmem:[%s3 + $0x20] sm:$0xf]
    %v78 = vld [vmem:[%s3 + $0x24] sm:$0xf]
    %v79 = vld [vmem:[%s3 + $0x28] sm:$0xf]
    %v80 = vld [vmem:[%s3 + $0x2c] sm:$0xf]
    %v81 = vld [vmem:[%s3 + $0x30] sm:$0xf]
    %v82 = vld [vmem:[%s3 + $0x34] sm:$0xf]
    %v83 = vld [vmem:[%s3 + $0x38] sm:$0xf]
    %v84 = vld [vmem:[%s3 + $0x3c] sm:$0xf]
    %v85 = vld [vmem:[%s7] sm:$0xf]
    %v86 = vld [vmem:[%s7 + $0x4] sm:$0xf]
    %v87 = vld [vmem:[%s7 + $0x8] sm:$0xf]
    %v88 = vld [vmem:[%s7 + $0xc] sm:$0xf]
    %v89 = vld [vmem:[%s4] sm:$0x1]
    %v90 = vld [vmem:[%s4 + $0x1] sm:$0x1]
    %v91 = vld [vmem:[%s4 + $0x2] sm:$0x1]
    %v92 = vld [vmem:[%s4 + $0x3] sm:$0x1]
    %v93 = vld [vmem:[%s5] sm:$0x1]
    %v94 = vld [vmem:[%s5 + $0x1] sm:$0x1]
    %v95 = vld [vmem:[%s5 + $0x2] sm:$0x1]
    %v96 = vld [vmem:[%s5 + $0x3] sm:$0x1]
    %v97 = vld [vmem:[%s6] sm:$0x1]
    %v98 = vld [vmem:[%s6 + $0x1] sm:$0x1]
    %v99 = vld [vmem:[%s6 + $0x2] sm:$0x1]
    %v100 = vld [vmem:[%s6 + $0x3] sm:$0x1]
    %v101 = vld [vmem:[%s8] sm:$0x1]
    %v102 = vld [vmem:[%s0] sm:$0xf]
    %v107 = vlaneseq
    %v108 = vshrl.u32 %v107, 7
    %v109 = vsub.s32 0, %v108
    %v110 = vrot.slane %v89, %v109
    %v111 = vlaneseq
    %v112 = vshrl.u32 %v111, 7
    %v113 = vsub.s32 0, %v112
    %v114 = vrot.slane %v90, %v113
    %v115 = vlaneseq
    %v116 = vshrl.u32 %v115, 7
    %v117 = vsub.s32 0, %v116
    %v118 = vrot.slane %v91, %v117
    %v119 = vlaneseq
    %v120 = vshrl.u32 %v119, 7
    %v121 = vsub.s32 0, %v120
    %v122 = vrot.slane %v92, %v121
    %v131 = vunpack.c.l.b16 %v37
    %v132 = vunpack.c.l.b16 %v38
    %v133 = vunpack.c.l.b16 %v39
    %v134 = vunpack.c.l.b16 %v40
    %v135 = vpack.c.b16 %v132, %v131
    %v136 = vpack.c.b16 %v134, %v133
    %vm139 = vcmask 261120
    %v141 = vsel %vm139, %v102, 0
    %143 = vmatprep.subr.bf16.mxu0 0
    %144 = vmatpush1.bf16.msra.mxu0 %v135
    %145 = vmatprep.subr.bf16.mxu0 0
    %146 = vmatpush1.bf16.msra.mxu0 %v136
    %147 = vmatprep.subr.bf16.mxu0 0
    %148 = vmatpush1.bf16.msra.mxu0 0
    %149 = vmatprep.subr.bf16.mxu0 0
    %150 = vmatpush1.bf16.msra.mxu0 0
    %151 = vmatprep.subr.bf16.mxu0 0
    %152 = vmatpush1.bf16.msra.mxu0 0
    %153 = vmatprep.subr.bf16.mxu0 0
    %154 = vmatpush1.bf16.msra.mxu0 0
    %155 = vmatprep.subr.bf16.mxu0 0
    %156 = vmatpush1.bf16.msra.mxu0 0
    %157 = vmatprep.subr.bf16.mxu0 0
    %158 = vmatpush1.bf16.msra.mxu0 0
    %159 = vmatprep.subr.bf16.mxu0 0
    %160 = vmatpush1.bf16.msra.mxu0 0
    %161 = vmatprep.subr.bf16.mxu0 0
    %162 = vmatpush1.bf16.msra.mxu0 0
    %163 = vmatprep.subr.bf16.mxu0 0
    %164 = vmatpush1.bf16.msra.mxu0 0
    %165 = vmatprep.subr.bf16.mxu0 0
    %166 = vmatpush1.bf16.msra.mxu0 0
    %167 = vmatprep.subr.bf16.mxu0 0
    %168 = vmatpush1.bf16.msra.mxu0 0
    %169 = vmatprep.subr.bf16.mxu0 0
    %170 = vmatpush1.bf16.msra.mxu0 0
    %171 = vmatprep.subr.bf16.mxu0 0
    %172 = vmatpush1.bf16.msra.mxu0 0
    %173 = vmatprep.subr.bf16.mxu0 0
    %174 = vmatpush1.bf16.msra.mxu0 0
    %175 = vmatprep.mubr.bf16.mxu0 0
    %176 = vmatmul.mubr.bf16.gmra.mrb[0].mxu0 %v141
    %v177 = vpop.f32.mrb[0].mxu0
    %v178 = vadd.f32 %v110, %v177
    %v179 = vpop.f32.mrb[0].mxu0
    %v180 = vpop.f32.mrb[0].mxu0
    %v181 = vpop.f32.mrb[0].mxu0
    %182 = vdwg.mxu0
    %v187 = vunpack.c.l.b16 %v41
    %v188 = vunpack.c.l.b16 %v42
    %v189 = vunpack.c.l.b16 %v43
    %v190 = vunpack.c.l.b16 %v44
    %v191 = vpack.c.b16 %v188, %v187
    %v192 = vpack.c.b16 %v190, %v189
    %195 = vmatprep.subr.bf16.mxu0 0
    %196 = vmatpush1.bf16.msra.mxu0 %v191
    %197 = vmatprep.subr.bf16.mxu0 0
    %198 = vmatpush1.bf16.msra.mxu0 %v192
    %199 = vmatprep.subr.bf16.mxu0 0
    %200 = vmatpush1.bf16.msra.mxu0 0
    %201 = vmatprep.subr.bf16.mxu0 0
    %202 = vmatpush1.bf16.msra.mxu0 0
    %203 = vmatprep.subr.bf16.mxu0 0
    %204 = vmatpush1.bf16.msra.mxu0 0
    %205 = vmatprep.subr.bf16.mxu0 0
    %206 = vmatpush1.bf16.msra.mxu0 0
    %207 = vmatprep.subr.bf16.mxu0 0
    %208 = vmatpush1.bf16.msra.mxu0 0
    %209 = vmatprep.subr.bf16.mxu0 0
    %210 = vmatpush1.bf16.msra.mxu0 0
    %211 = vmatprep.subr.bf16.mxu0 0
    %212 = vmatpush1.bf16.msra.mxu0 0
    %213 = vmatprep.subr.bf16.mxu0 0
    %214 = vmatpush1.bf16.msra.mxu0 0
    %215 = vmatprep.subr.bf16.mxu0 0
    %216 = vmatpush1.bf16.msra.mxu0 0
    %217 = vmatprep.subr.bf16.mxu0 0
    %218 = vmatpush1.bf16.msra.mxu0 0
    %219 = vmatprep.subr.bf16.mxu0 0
    %220 = vmatpush1.bf16.msra.mxu0 0
    %221 = vmatprep.subr.bf16.mxu0 0
    %222 = vmatpush1.bf16.msra.mxu0 0
    %223 = vmatprep.subr.bf16.mxu0 0
    %224 = vmatpush1.bf16.msra.mxu0 0
    %225 = vmatprep.subr.bf16.mxu0 0
    %226 = vmatpush1.bf16.msra.mxu0 0
    %227 = vmatprep.mubr.bf16.mxu0 0
    %228 = vmatmul.mubr.bf16.gmra.mrb[0].mxu0 %v141
    %v229 = vpop.f32.mrb[0].mxu0
    %v230 = vadd.f32 %v114, %v229
    %v231 = vpop.f32.mrb[0].mxu0
    %v232 = vpop.f32.mrb[0].mxu0
    %v233 = vpop.f32.mrb[0].mxu0
    %234 = vdwg.mxu0
    %v239 = vunpack.c.l.b16 %v45
    %v240 = vunpack.c.l.b16 %v46
    %v241 = vunpack.c.l.b16 %v47
    %v242 = vunpack.c.l.b16 %v48
    %v243 = vpack.c.b16 %v240, %v239
    %v244 = vpack.c.b16 %v242, %v241
    %247 = vmatprep.subr.bf16.mxu0 0
    %248 = vmatpush1.bf16.msra.mxu0 %v243
    %249 = vmatprep.subr.bf16.mxu0 0
    %250 = vmatpush1.bf16.msra.mxu0 %v244
    %251 = vmatprep.subr.bf16.mxu0 0
    %252 = vmatpush1.bf16.msra.mxu0 0
    %253 = vmatprep.subr.bf16.mxu0 0
    %254 = vmatpush1.bf16.msra.mxu0 0
    %255 = vmatprep.subr.bf16.mxu0 0
    %256 = vmatpush1.bf16.msra.mxu0 0
    %257 = vmatprep.subr.bf16.mxu0 0
    %258 = vmatpush1.bf16.msra.mxu0 0
    %259 = vmatprep.subr.bf16.mxu0 0
    %260 = vmatpush1.bf16.msra.mxu0 0
    %261 = vmatprep.subr.bf16.mxu0 0
    %262 = vmatpush1.bf16.msra.mxu0 0
    %263 = vmatprep.subr.bf16.mxu0 0
    %264 = vmatpush1.bf16.msra.mxu0 0
    %265 = vmatprep.subr.bf16.mxu0 0
    %266 = vmatpush1.bf16.msra.mxu0 0
    %267 = vmatprep.subr.bf16.mxu0 0
    %268 = vmatpush1.bf16.msra.mxu0 0
    %269 = vmatprep.subr.bf16.mxu0 0
    %270 = vmatpush1.bf16.msra.mxu0 0
    %271 = vmatprep.subr.bf16.mxu0 0
    %272 = vmatpush1.bf16.msra.mxu0 0
    %273 = vmatprep.subr.bf16.mxu0 0
    %274 = vmatpush1.bf16.msra.mxu0 0
    %275 = vmatprep.subr.bf16.mxu0 0
    %276 = vmatpush1.bf16.msra.mxu0 0
    %277 = vmatprep.subr.bf16.mxu0 0
    %278 = vmatpush1.bf16.msra.mxu0 0
    %279 = vmatprep.mubr.bf16.mxu0 0
    %280 = vmatmul.mubr.bf16.gmra.mrb[0].mxu0 %v141
    %v281 = vpop.f32.mrb[0].mxu0
    %v282 = vadd.f32 %v118, %v281
    %v283 = vpop.f32.mrb[0].mxu0
    %v284 = vpop.f32.mrb[0].mxu0
    %v285 = vpop.f32.mrb[0].mxu0
    %286 = vdwg.mxu0
    %v291 = vunpack.c.l.b16 %v49
    %v292 = vunpack.c.l.b16 %v50
    %v293 = vunpack.c.l.b16 %v51
    %v294 = vunpack.c.l.b16 %v52
    %v295 = vpack.c.b16 %v292, %v291
    %v296 = vpack.c.b16 %v294, %v293
    %299 = vmatprep.subr.bf16.mxu0 0
    %300 = vmatpush1.bf16.msra.mxu0 %v295
    %301 = vmatprep.subr.bf16.mxu0 0
    %302 = vmatpush1.bf16.msra.mxu0 %v296
    %303 = vmatprep.subr.bf16.mxu0 0
    %304 = vmatpush1.bf16.msra.mxu0 0
    %305 = vmatprep.subr.bf16.mxu0 0
    %306 = vmatpush1.bf16.msra.mxu0 0
    %307 = vmatprep.subr.bf16.mxu0 0
    %308 = vmatpush1.bf16.msra.mxu0 0
    %309 = vmatprep.subr.bf16.mxu0 0
    %310 = vmatpush1.bf16.msra.mxu0 0
    %311 = vmatprep.subr.bf16.mxu0 0
    %312 = vmatpush1.bf16.msra.mxu0 0
    %313 = vmatprep.subr.bf16.mxu0 0
    %314 = vmatpush1.bf16.msra.mxu0 0
    %315 = vmatprep.subr.bf16.mxu0 0
    %316 = vmatpush1.bf16.msra.mxu0 0
    %317 = vmatprep.subr.bf16.mxu0 0
    %318 = vmatpush1.bf16.msra.mxu0 0
    %319 = vmatprep.subr.bf16.mxu0 0
    %320 = vmatpush1.bf16.msra.mxu0 0
    %321 = vmatprep.subr.bf16.mxu0 0
    %322 = vmatpush1.bf16.msra.mxu0 0
    %323 = vmatprep.subr.bf16.mxu0 0
    %324 = vmatpush1.bf16.msra.mxu0 0
    %325 = vmatprep.subr.bf16.mxu0 0
    %326 = vmatpush1.bf16.msra.mxu0 0
    %327 = vmatprep.subr.bf16.mxu0 0
    %328 = vmatpush1.bf16.msra.mxu0 0
    %329 = vmatprep.subr.bf16.mxu0 0
    %330 = vmatpush1.bf16.msra.mxu0 0
    %331 = vmatprep.mubr.bf16.mxu0 0
    %332 = vmatmul.mubr.bf16.gmra.mrb[0].mxu0 %v141
    %v333 = vpop.f32.mrb[0].mxu0
    %v334 = vadd.f32 %v122, %v333
    %v335 = vpop.f32.mrb[0].mxu0
    %v336 = vpop.f32.mrb[0].mxu0
    %v337 = vpop.f32.mrb[0].mxu0
    %338 = vdwg.mxu0
    %v343 = vlaneseq
    %v344 = vshrl.u32 %v343, 7
    %v345 = vsub.s32 0, %v344
    %v346 = vrot.slane %v93, %v345
    %v347 = vlaneseq
    %v348 = vshrl.u32 %v347, 7
    %v349 = vsub.s32 0, %v348
    %v350 = vrot.slane %v94, %v349
    %v351 = vlaneseq
    %v352 = vshrl.u32 %v351, 7
    %v353 = vsub.s32 0, %v352
    %v354 = vrot.slane %v95, %v353
    %v355 = vlaneseq
    %v356 = vshrl.u32 %v355, 7
    %v357 = vsub.s32 0, %v356
    %v358 = vrot.slane %v96, %v357
    %v367 = vunpack.c.l.b16 %v53
    %v368 = vunpack.c.l.b16 %v54
    %v369 = vunpack.c.l.b16 %v55
    %v370 = vunpack.c.l.b16 %v56
    %v371 = vpack.c.b16 %v368, %v367
    %v372 = vpack.c.b16 %v370, %v369
    %375 = vmatprep.subr.bf16.mxu0 0
    %376 = vmatpush1.bf16.msra.mxu0 %v371
    %377 = vmatprep.subr.bf16.mxu0 0
    %378 = vmatpush1.bf16.msra.mxu0 %v372
    %379 = vmatprep.subr.bf16.mxu0 0
    %380 = vmatpush1.bf16.msra.mxu0 0
    %381 = vmatprep.subr.bf16.mxu0 0
    %382 = vmatpush1.bf16.msra.mxu0 0
    %383 = vmatprep.subr.bf16.mxu0 0
    %384 = vmatpush1.bf16.msra.mxu0 0
    %385 = vmatprep.subr.bf16.mxu0 0
    %386 = vmatpush1.bf16.msra.mxu0 0
    %387 = vmatprep.subr.bf16.mxu0 0
    %388 = vmatpush1.bf16.msra.mxu0 0
    %389 = vmatprep.subr.bf16.mxu0 0
    %390 = vmatpush1.bf16.msra.mxu0 0
    %391 = vmatprep.subr.bf16.mxu0 0
    %392 = vmatpush1.bf16.msra.mxu0 0
    %393 = vmatprep.subr.bf16.mxu0 0
    %394 = vmatpush1.bf16.msra.mxu0 0
    %395 = vmatprep.subr.bf16.mxu0 0
    %396 = vmatpush1.bf16.msra.mxu0 0
    %397 = vmatprep.subr.bf16.mxu0 0
    %398 = vmatpush1.bf16.msra.mxu0 0
    %399 = vmatprep.subr.bf16.mxu0 0
    %400 = vmatpush1.bf16.msra.mxu0 0
    %401 = vmatprep.subr.bf16.mxu0 0
    %402 = vmatpush1.bf16.msra.mxu0 0
    %403 = vmatprep.subr.bf16.mxu0 0
    %404 = vmatpush1.bf16.msra.mxu0 0
    %405 = vmatprep.subr.bf16.mxu0 0
    %406 = vmatpush1.bf16.msra.mxu0 0
    %407 = vmatprep.mubr.bf16.mxu0 0
    %408 = vmatmul.mubr.bf16.gmra.mrb[0].mxu0 %v141
    %v409 = vpop.f32.mrb[0].mxu0
    %v410 = vadd.f32 %v346, %v409
    %v411 = vpop.f32.mrb[0].mxu0
    %v412 = vpop.f32.mrb[0].mxu0
    %v413 = vpop.f32.mrb[0].mxu0
    %414 = vdwg.mxu0
    %v419 = vunpack.c.l.b16 %v57
    %v420 = vunpack.c.l.b16 %v58
    %v421 = vunpack.c.l.b16 %v59
    %v422 = vunpack.c.l.b16 %v60
    %v423 = vpack.c.b16 %v420, %v419
    %v424 = vpack.c.b16 %v422, %v421
    %427 = vmatprep.subr.bf16.mxu0 0
    %428 = vmatpush1.bf16.msra.mxu0 %v423
    %429 = vmatprep.subr.bf16.mxu0 0
    %430 = vmatpush1.bf16.msra.mxu0 %v424
    %431 = vmatprep.subr.bf16.mxu0 0
    %432 = vmatpush1.bf16.msra.mxu0 0
    %433 = vmatprep.subr.bf16.mxu0 0
    %434 = vmatpush1.bf16.msra.mxu0 0
    %435 = vmatprep.subr.bf16.mxu0 0
    %436 = vmatpush1.bf16.msra.mxu0 0
    %437 = vmatprep.subr.bf16.mxu0 0
    %438 = vmatpush1.bf16.msra.mxu0 0
    %439 = vmatprep.subr.bf16.mxu0 0
    %440 = vmatpush1.bf16.msra.mxu0 0
    %441 = vmatprep.subr.bf16.mxu0 0
    %442 = vmatpush1.bf16.msra.mxu0 0
    %443 = vmatprep.subr.bf16.mxu0 0
    %444 = vmatpush1.bf16.msra.mxu0 0
    %445 = vmatprep.subr.bf16.mxu0 0
    %446 = vmatpush1.bf16.msra.mxu0 0
    %447 = vmatprep.subr.bf16.mxu0 0
    %448 = vmatpush1.bf16.msra.mxu0 0
    %449 = vmatprep.subr.bf16.mxu0 0
    %450 = vmatpush1.bf16.msra.mxu0 0
    %451 = vmatprep.subr.bf16.mxu0 0
    %452 = vmatpush1.bf16.msra.mxu0 0
    %453 = vmatprep.subr.bf16.mxu0 0
    %454 = vmatpush1.bf16.msra.mxu0 0
    %455 = vmatprep.subr.bf16.mxu0 0
    %456 = vmatpush1.bf16.msra.mxu0 0
    %457 = vmatprep.subr.bf16.mxu0 0
    %458 = vmatpush1.bf16.msra.mxu0 0
    %459 = vmatprep.mubr.bf16.mxu0 0
    %460 = vmatmul.mubr.bf16.gmra.mrb[0].mxu0 %v141
    %v461 = vpop.f32.mrb[0].mxu0
    %v462 = vadd.f32 %v350, %v461
    %v463 = vpop.f32.mrb[0].mxu0
    %v464 = vpop.f32.mrb[0].mxu0
    %v465 = vpop.f32.mrb[0].mxu0
    %466 = vdwg.mxu0
    %v471 = vunpack.c.l.b16 %v61
    %v472 = vunpack.c.l.b16 %v62
    %v473 = vunpack.c.l.b16 %v63
    %v474 = vunpack.c.l.b16 %v64
    %v475 = vpack.c.b16 %v472, %v471
    %v476 = vpack.c.b16 %v474, %v473
    %479 = vmatprep.subr.bf16.mxu0 0
    %480 = vmatpush1.bf16.msra.mxu0 %v475
    %481 = vmatprep.subr.bf16.mxu0 0
    %482 = vmatpush1.bf16.msra.mxu0 %v476
    %483 = vmatprep.subr.bf16.mxu0 0
    %484 = vmatpush1.bf16.msra.mxu0 0
    %485 = vmatprep.subr.bf16.mxu0 0
    %486 = vmatpush1.bf16.msra.mxu0 0
    %487 = vmatprep.subr.bf16.mxu0 0
    %488 = vmatpush1.bf16.msra.mxu0 0
    %489 = vmatprep.subr.bf16.mxu0 0
    %490 = vmatpush1.bf16.msra.mxu0 0
    %491 = vmatprep.subr.bf16.mxu0 0
    %492 = vmatpush1.bf16.msra.mxu0 0
    %493 = vmatprep.subr.bf16.mxu0 0
    %494 = vmatpush1.bf16.msra.mxu0 0
    %495 = vmatprep.subr.bf16.mxu0 0
    %496 = vmatpush1.bf16.msra.mxu0 0
    %497 = vmatprep.subr.bf16.mxu0 0
    %498 = vmatpush1.bf16.msra.mxu0 0
    %499 = vmatprep.subr.bf16.mxu0 0
    %500 = vmatpush1.bf16.msra.mxu0 0
    %501 = vmatprep.subr.bf16.mxu0 0
    %502 = vmatpush1.bf16.msra.mxu0 0
    %503 = vmatprep.subr.bf16.mxu0 0
    %504 = vmatpush1.bf16.msra.mxu0 0
    %505 = vmatprep.subr.bf16.mxu0 0
    %506 = vmatpush1.bf16.msra.mxu0 0
    %507 = vmatprep.subr.bf16.mxu0 0
    %508 = vmatpush1.bf16.msra.mxu0 0
    %509 = vmatprep.subr.bf16.mxu0 0
    %510 = vmatpush1.bf16.msra.mxu0 0
    %511 = vmatprep.mubr.bf16.mxu0 0
    %512 = vmatmul.mubr.bf16.gmra.mrb[0].mxu0 %v141
    %v513 = vpop.f32.mrb[0].mxu0
    %v514 = vadd.f32 %v354, %v513
    %v515 = vpop.f32.mrb[0].mxu0
    %v516 = vpop.f32.mrb[0].mxu0
    %v517 = vpop.f32.mrb[0].mxu0
    %518 = vdwg.mxu0
    %v523 = vunpack.c.l.b16 %v65
    %v524 = vunpack.c.l.b16 %v66
    %v525 = vunpack.c.l.b16 %v67
    %v526 = vunpack.c.l.b16 %v68
    %v527 = vpack.c.b16 %v524, %v523
    %v528 = vpack.c.b16 %v526, %v525
    %531 = vmatprep.subr.bf16.mxu0 0
    %532 = vmatpush1.bf16.msra.mxu0 %v527
    %533 = vmatprep.subr.bf16.mxu0 0
    %534 = vmatpush1.bf16.msra.mxu0 %v528
    %535 = vmatprep.subr.bf16.mxu0 0
    %536 = vmatpush1.bf16.msra.mxu0 0
    %537 = vmatprep.subr.bf16.mxu0 0
    %538 = vmatpush1.bf16.msra.mxu0 0
    %539 = vmatprep.subr.bf16.mxu0 0
    %540 = vmatpush1.bf16.msra.mxu0 0
    %541 = vmatprep.subr.bf16.mxu0 0
    %542 = vmatpush1.bf16.msra.mxu0 0
    %543 = vmatprep.subr.bf16.mxu0 0
    %544 = vmatpush1.bf16.msra.mxu0 0
    %545 = vmatprep.subr.bf16.mxu0 0
    %546 = vmatpush1.bf16.msra.mxu0 0
    %547 = vmatprep.subr.bf16.mxu0 0
    %548 = vmatpush1.bf16.msra.mxu0 0
    %549 = vmatprep.subr.bf16.mxu0 0
    %550 = vmatpush1.bf16.msra.mxu0 0
    %551 = vmatprep.subr.bf16.mxu0 0
    %552 = vmatpush1.bf16.msra.mxu0 0
    %553 = vmatprep.subr.bf16.mxu0 0
    %554 = vmatpush1.bf16.msra.mxu0 0
    %555 = vmatprep.subr.bf16.mxu0 0
    %556 = vmatpush1.bf16.msra.mxu0 0
    %557 = vmatprep.subr.bf16.mxu0 0
    %558 = vmatpush1.bf16.msra.mxu0 0
    %559 = vmatprep.subr.bf16.mxu0 0
    %560 = vmatpush1.bf16.msra.mxu0 0
    %561 = vmatprep.subr.bf16.mxu0 0
    %562 = vmatpush1.bf16.msra.mxu0 0
    %563 = vmatprep.mubr.bf16.mxu0 0
    %564 = vmatmul.mubr.bf16.gmra.mrb[0].mxu0 %v141
    %v565 = vpop.f32.mrb[0].mxu0
    %v566 = vadd.f32 %v358, %v565
    %v567 = vpop.f32.mrb[0].mxu0
    %v568 = vpop.f32.mrb[0].mxu0
    %v569 = vpop.f32.mrb[0].mxu0
    %570 = vdwg.mxu0
    %v575 = vlaneseq
    %v576 = vshrl.u32 %v575, 7
    %v577 = vsub.s32 0, %v576
    %v578 = vrot.slane %v97, %v577
    %v579 = vlaneseq
    %v580 = vshrl.u32 %v579, 7
    %v581 = vsub.s32 0, %v580
    %v582 = vrot.slane %v98, %v581
    %v583 = vlaneseq
    %v584 = vshrl.u32 %v583, 7
    %v585 = vsub.s32 0, %v584
    %v586 = vrot.slane %v99, %v585
    %v587 = vlaneseq
    %v588 = vshrl.u32 %v587, 7
    %v589 = vsub.s32 0, %v588
    %v590 = vrot.slane %v100, %v589
    %v599 = vunpack.c.l.b16 %v69
    %v600 = vunpack.c.l.b16 %v70
    %v601 = vunpack.c.l.b16 %v71
    %v602 = vunpack.c.l.b16 %v72
    %v603 = vpack.c.b16 %v600, %v599
    %v604 = vpack.c.b16 %v602, %v601
    %607 = vmatprep.subr.bf16.mxu0 0
    %608 = vmatpush1.bf16.msra.mxu0 %v603
    %609 = vmatprep.subr.bf16.mxu0 0
    %610 = vmatpush1.bf16.msra.mxu0 %v604
    %611 = vmatprep.subr.bf16.mxu0 0
    %612 = vmatpush1.bf16.msra.mxu0 0
    %613 = vmatprep.subr.bf16.mxu0 0
    %614 = vmatpush1.bf16.msra.mxu0 0
    %615 = vmatprep.subr.bf16.mxu0 0
    %616 = vmatpush1.bf16.msra.mxu0 0
    %617 = vmatprep.subr.bf16.mxu0 0
    %618 = vmatpush1.bf16.msra.mxu0 0
    %619 = vmatprep.subr.bf16.mxu0 0
    %620 = vmatpush1.bf16.msra.mxu0 0
    %621 = vmatprep.subr.bf16.mxu0 0
    %622 = vmatpush1.bf16.msra.mxu0 0
    %623 = vmatprep.subr.bf16.mxu0 0
    %624 = vmatpush1.bf16.msra.mxu0 0
    %625 = vmatprep.subr.bf16.mxu0 0
    %626 = vmatpush1.bf16.msra.mxu0 0
    %627 = vmatprep.subr.bf16.mxu0 0
    %628 = vmatpush1.bf16.msra.mxu0 0
    %629 = vmatprep.subr.bf16.mxu0 0
    %630 = vmatpush1.bf16.msra.mxu0 0
    %631 = vmatprep.subr.bf16.mxu0 0
    %632 = vmatpush1.bf16.msra.mxu0 0
    %633 = vmatprep.subr.bf16.mxu0 0
    %634 = vmatpush1.bf16.msra.mxu0 0
    %635 = vmatprep.subr.bf16.mxu0 0
    %636 = vmatpush1.bf16.msra.mxu0 0
    %637 = vmatprep.subr.bf16.mxu0 0
    %638 = vmatpush1.bf16.msra.mxu0 0
    %639 = vmatprep.mubr.bf16.mxu0 0
    %640 = vmatmul.mubr.bf16.gmra.mrb[0].mxu0 %v141
    %v641 = vpop.f32.mrb[0].mxu0
    %v642 = vadd.f32 %v578, %v641
    %v643 = vpop.f32.mrb[0].mxu0
    %v644 = vpop.f32.mrb[0].mxu0
    %v645 = vpop.f32.mrb[0].mxu0
    %646 = vdwg.mxu0
    %v651 = vunpack.c.l.b16 %v73
    %v652 = vunpack.c.l.b16 %v74
    %v653 = vunpack.c.l.b16 %v75
    %v654 = vunpack.c.l.b16 %v76
    %v655 = vpack.c.b16 %v652, %v651
    %v656 = vpack.c.b16 %v654, %v653
    %659 = vmatprep.subr.bf16.mxu0 0
    %660 = vmatpush1.bf16.msra.mxu0 %v655
    %661 = vmatprep.subr.bf16.mxu0 0
    %662 = vmatpush1.bf16.msra.mxu0 %v656
    %663 = vmatprep.subr.bf16.mxu0 0
    %664 = vmatpush1.bf16.msra.mxu0 0
    %665 = vmatprep.subr.bf16.mxu0 0
    %666 = vmatpush1.bf16.msra.mxu0 0
    %667 = vmatprep.subr.bf16.mxu0 0
    %668 = vmatpush1.bf16.msra.mxu0 0
    %669 = vmatprep.subr.bf16.mxu0 0
    %670 = vmatpush1.bf16.msra.mxu0 0
    %671 = vmatprep.subr.bf16.mxu0 0
    %672 = vmatpush1.bf16.msra.mxu0 0
    %673 = vmatprep.subr.bf16.mxu0 0
    %674 = vmatpush1.bf16.msra.mxu0 0
    %675 = vmatprep.subr.bf16.mxu0 0
    %676 = vmatpush1.bf16.msra.mxu0 0
    %677 = vmatprep.subr.bf16.mxu0 0
    %678 = vmatpush1.bf16.msra.mxu0 0
    %679 = vmatprep.subr.bf16.mxu0 0
    %680 = vmatpush1.bf16.msra.mxu0 0
    %681 = vmatprep.subr.bf16.mxu0 0
    %682 = vmatpush1.bf16.msra.mxu0 0
    %683 = vmatprep.subr.bf16.mxu0 0
    %684 = vmatpush1.bf16.msra.mxu0 0
    %685 = vmatprep.subr.bf16.mxu0 0
    %686 = vmatpush1.bf16.msra.mxu0 0
    %687 = vmatprep.subr.bf16.mxu0 0
    %688 = vmatpush1.bf16.msra.mxu0 0
    %689 = vmatprep.subr.bf16.mxu0 0
    %690 = vmatpush1.bf16.msra.mxu0 0
    %691 = vmatprep.mubr.bf16.mxu0 0
    %692 = vmatmul.mubr.bf16.gmra.mrb[0].mxu0 %v141
    %v693 = vpop.f32.mrb[0].mxu0
    %v694 = vadd.f32 %v582, %v693
    %v695 = vpop.f32.mrb[0].mxu0
    %v696 = vpop.f32.mrb[0].mxu0
    %v697 = vpop.f32.mrb[0].mxu0
    %698 = vdwg.mxu0
    %v703 = vunpack.c.l.b16 %v77
    %v704 = vunpack.c.l.b16 %v78
    %v705 = vunpack.c.l.b16 %v79
    %v706 = vunpack.c.l.b16 %v80
    %v707 = vpack.c.b16 %v704, %v703
    %v708 = vpack.c.b16 %v706, %v705
    %711 = vmatprep.subr.bf16.mxu0 0
    %712 = vmatpush1.bf16.msra.mxu0 %v707
    %713 = vmatprep.subr.bf16.mxu0 0
    %714 = vmatpush1.bf16.msra.mxu0 %v708
    %715 = vmatprep.subr.bf16.mxu0 0
    %716 = vmatpush1.bf16.msra.mxu0 0
    %717 = vmatprep.subr.bf16.mxu0 0
    %718 = vmatpush1.bf16.msra.mxu0 0
    %719 = vmatprep.subr.bf16.mxu0 0
    %720 = vmatpush1.bf16.msra.mxu0 0
    %721 = vmatprep.subr.bf16.mxu0 0
    %722 = vmatpush1.bf16.msra.mxu0 0
    %723 = vmatprep.subr.bf16.mxu0 0
    %724 = vmatpush1.bf16.msra.mxu0 0
    %725 = vmatprep.subr.bf16.mxu0 0
    %726 = vmatpush1.bf16.msra.mxu0 0
    %727 = vmatprep.subr.bf16.mxu0 0
    %728 = vmatpush1.bf16.msra.mxu0 0
    %729 = vmatprep.subr.bf16.mxu0 0
    %730 = vmatpush1.bf16.msra.mxu0 0
    %731 = vmatprep.subr.bf16.mxu0 0
    %732 = vmatpush1.bf16.msra.mxu0 0
    %733 = vmatprep.subr.bf16.mxu0 0
    %734 = vmatpush1.bf16.msra.mxu0 0
    %735 = vmatprep.subr.bf16.mxu0 0
    %736 = vmatpush1.bf16.msra.mxu0 0
    %737 = vmatprep.subr.bf16.mxu0 0
    %738 = vmatpush1.bf16.msra.mxu0 0
    %739 = vmatprep.subr.bf16.mxu0 0
    %740 = vmatpush1.bf16.msra.mxu0 0
    %741 = vmatprep.subr.bf16.mxu0 0
    %742 = vmatpush1.bf16.msra.mxu0 0
    %743 = vmatprep.mubr.bf16.mxu0 0
    %744 = vmatmul.mubr.bf16.gmra.mrb[0].mxu0 %v141
    %v745 = vpop.f32.mrb[0].mxu0
    %v746 = vadd.f32 %v586, %v745
    %v747 = vpop.f32.mrb[0].mxu0
    %v748 = vpop.f32.mrb[0].mxu0
    %v749 = vpop.f32.mrb[0].mxu0
    %750 = vdwg.mxu0
    %v755 = vunpack.c.l.b16 %v81
    %v756 = vunpack.c.l.b16 %v82
    %v757 = vunpack.c.l.b16 %v83
    %v758 = vunpack.c.l.b16 %v84
    %v759 = vpack.c.b16 %v756, %v755
    %v760 = vpack.c.b16 %v758, %v757
    %763 = vmatprep.subr.bf16.mxu0 0
    %764 = vmatpush1.bf16.msra.mxu0 %v759
    %765 = vmatprep.subr.bf16.mxu0 0
    %766 = vmatpush1.bf16.msra.mxu0 %v760
    %767 = vmatprep.subr.bf16.mxu0 0
    %768 = vmatpush1.bf16.msra.mxu0 0
    %769 = vmatprep.subr.bf16.mxu0 0
    %770 = vmatpush1.bf16.msra.mxu0 0
    %771 = vmatprep.subr.bf16.mxu0 0
    %772 = vmatpush1.bf16.msra.mxu0 0
    %773 = vmatprep.subr.bf16.mxu0 0
    %774 = vmatpush1.bf16.msra.mxu0 0
    %775 = vmatprep.subr.bf16.mxu0 0
    %776 = vmatpush1.bf16.msra.mxu0 0
    %777 = vmatprep.subr.bf16.mxu0 0
    %778 = vmatpush1.bf16.msra.mxu0 0
    %779 = vmatprep.subr.bf16.mxu0 0
    %780 = vmatpush1.bf16.msra.mxu0 0
    %781 = vmatprep.subr.bf16.mxu0 0
    %782 = vmatpush1.bf16.msra.mxu0 0
    %783 = vmatprep.subr.bf16.mxu0 0
    %784 = vmatpush1.bf16.msra.mxu0 0
    %785 = vmatprep.subr.bf16.mxu0 0
    %786 = vmatpush1.bf16.msra.mxu0 0
    %787 = vmatprep.subr.bf16.mxu0 0
    %788 = vmatpush1.bf16.msra.mxu0 0
    %789 = vmatprep.subr.bf16.mxu0 0
    %790 = vmatpush1.bf16.msra.mxu0 0
    %791 = vmatprep.subr.bf16.mxu0 0
    %792 = vmatpush1.bf16.msra.mxu0 0
    %793 = vmatprep.subr.bf16.mxu0 0
    %794 = vmatpush1.bf16.msra.mxu0 0
    %795 = vmatprep.mubr.bf16.mxu0 0
    %796 = vmatmul.mubr.bf16.gmra.mrb[0].mxu0 %v141
    %v797 = vpop.f32.mrb[0].mxu0
    %v798 = vadd.f32 %v590, %v797
    %v799 = vpop.f32.mrb[0].mxu0
    %v800 = vpop.f32.mrb[0].mxu0
    %v801 = vpop.f32.mrb[0].mxu0
    %802 = vdwg.mxu0
    %v803 = vpack.c.bf16 %v178, %v178
    %v804 = vpack.c.bf16 %v230, %v230
    %v805 = vpack.c.bf16 %v282, %v282
    %v806 = vpack.c.bf16 %v334, %v334
    %v807 = vpack.c.bf16 %v410, %v410
    %v808 = vpack.c.bf16 %v462, %v462
    %v809 = vpack.c.bf16 %v514, %v514
    %v810 = vpack.c.bf16 %v566, %v566
    %vm811 = vcmask 64512
    %v813 = vsel %vm811, %v803, 0
    %v816 = vsel %vm811, %v807, 0
    %818 = vmatprep.subr.bf16.mxu0 0
    %819 = vmatpush1.bf16.xpose.msra.mxu0 %v816
    %820 = vmatprep.subr.bf16.mxu0 0
    %821 = vmatpush1.bf16.xpose.msra.mxu0 0
    %822 = vmatprep.subr.bf16.mxu0 0
    %823 = vmatpush1.bf16.xpose.msra.mxu0 0
    %824 = vmatprep.subr.bf16.mxu0 0
    %825 = vmatpush1.bf16.xpose.msra.mxu0 0
    %826 = vmatprep.subr.bf16.mxu0 0
    %827 = vmatpush1.bf16.xpose.msra.mxu0 0
    %828 = vmatprep.subr.bf16.mxu0 0
    %829 = vmatpush1.bf16.xpose.msra.mxu0 0
    %830 = vmatprep.subr.bf16.mxu0 0
    %831 = vmatpush1.bf16.xpose.msra.mxu0 0
    %832 = vmatprep.subr.bf16.mxu0 0
    %833 = vmatpush1.bf16.xpose.msra.mxu0 0
    %834 = vmatprep.subr.bf16.mxu0 0
    %835 = vmatpush1.bf16.xpose.msra.mxu0 0
    %836 = vmatprep.subr.bf16.mxu0 0
    %837 = vmatpush1.bf16.xpose.msra.mxu0 0
    %838 = vmatprep.subr.bf16.mxu0 0
    %839 = vmatpush1.bf16.xpose.msra.mxu0 0
    %840 = vmatprep.subr.bf16.mxu0 0
    %841 = vmatpush1.bf16.xpose.msra.mxu0 0
    %842 = vmatprep.subr.bf16.mxu0 0
    %843 = vmatpush1.bf16.xpose.msra.mxu0 0
    %844 = vmatprep.subr.bf16.mxu0 0
    %845 = vmatpush1.bf16.xpose.msra.mxu0 0
    %846 = vmatprep.subr.bf16.mxu0 0
    %847 = vmatpush1.bf16.xpose.msra.mxu0 0
    %848 = vmatprep.subr.bf16.mxu0 0
    %849 = vmatpush1.bf16.xpose.msra.mxu0 0
    %850 = vmatprep.mubr.bf16.mxu0 0
    %851 = vmatmul.mubr.bf16.gmra.mrb[0].mxu0 %v813
    %v852 = vpop.f32.mrb[0].mxu0
    %v853 = vadd.f32 0.0, %v852
    %v854 = vpop.f32.mrb[0].mxu0
    %v855 = vpop.f32.mrb[0].mxu0
    %v856 = vpop.f32.mrb[0].mxu0
    %857 = vdwg.mxu0
    %v859 = vsel %vm811, %v804, 0
    %v862 = vsel %vm811, %v808, 0
    %864 = vmatprep.subr.bf16.mxu0 0
    %865 = vmatpush1.bf16.xpose.msra.mxu0 %v862
    %866 = vmatprep.subr.bf16.mxu0 0
    %867 = vmatpush1.bf16.xpose.msra.mxu0 0
    %868 = vmatprep.subr.bf16.mxu0 0
    %869 = vmatpush1.bf16.xpose.msra.mxu0 0
    %870 = vmatprep.subr.bf16.mxu0 0
    %871 = vmatpush1.bf16.xpose.msra.mxu0 0
    %872 = vmatprep.subr.bf16.mxu0 0
    %873 = vmatpush1.bf16.xpose.msra.mxu0 0
    %874 = vmatprep.subr.bf16.mxu0 0
    %875 = vmatpush1.bf16.xpose.msra.mxu0 0
    %876 = vmatprep.subr.bf16.mxu0 0
    %877 = vmatpush1.bf16.xpose.msra.mxu0 0
    %878 = vmatprep.subr.bf16.mxu0 0
    %879 = vmatpush1.bf16.xpose.msra.mxu0 0
    %880 = vmatprep.subr.bf16.mxu0 0
    %881 = vmatpush1.bf16.xpose.msra.mxu0 0
    %882 = vmatprep.subr.bf16.mxu0 0
    %883 = vmatpush1.bf16.xpose.msra.mxu0 0
    %884 = vmatprep.subr.bf16.mxu0 0
    %885 = vmatpush1.bf16.xpose.msra.mxu0 0
    %886 = vmatprep.subr.bf16.mxu0 0
    %887 = vmatpush1.bf16.xpose.msra.mxu0 0
    %888 = vmatprep.subr.bf16.mxu0 0
    %889 = vmatpush1.bf16.xpose.msra.mxu0 0
    %890 = vmatprep.subr.bf16.mxu0 0
    %891 = vmatpush1.bf16.xpose.msra.mxu0 0
    %892 = vmatprep.subr.bf16.mxu0 0
    %893 = vmatpush1.bf16.xpose.msra.mxu0 0
    %894 = vmatprep.subr.bf16.mxu0 0
    %895 = vmatpush1.bf16.xpose.msra.mxu0 0
    %896 = vmatprep.mubr.bf16.mxu0 0
    %897 = vmatmul.mubr.bf16.gmra.mrb[0].mxu0 %v859
    %v898 = vpop.f32.mrb[0].mxu0
    %v899 = vadd.f32 0.0, %v898
    %v900 = vpop.f32.mrb[0].mxu0
    %v901 = vpop.f32.mrb[0].mxu0
    %v902 = vpop.f32.mrb[0].mxu0
    %903 = vdwg.mxu0
    %v905 = vsel %vm811, %v805, 0
    %v908 = vsel %vm811, %v809, 0
    %910 = vmatprep.subr.bf16.mxu0 0
    %911 = vmatpush1.bf16.xpose.msra.mxu0 %v908
    %912 = vmatprep.subr.bf16.mxu0 0
    %913 = vmatpush1.bf16.xpose.msra.mxu0 0
    %914 = vmatprep.subr.bf16.mxu0 0
    %915 = vmatpush1.bf16.xpose.msra.mxu0 0
    %916 = vmatprep.subr.bf16.mxu0 0
    %917 = vmatpush1.bf16.xpose.msra.mxu0 0
    %918 = vmatprep.subr.bf16.mxu0 0
    %919 = vmatpush1.bf16.xpose.msra.mxu0 0
    %920 = vmatprep.subr.bf16.mxu0 0
    %921 = vmatpush1.bf16.xpose.msra.mxu0 0
    %922 = vmatprep.subr.bf16.mxu0 0
    %923 = vmatpush1.bf16.xpose.msra.mxu0 0
    %924 = vmatprep.subr.bf16.mxu0 0
    %925 = vmatpush1.bf16.xpose.msra.mxu0 0
    %926 = vmatprep.subr.bf16.mxu0 0
    %927 = vmatpush1.bf16.xpose.msra.mxu0 0
    %928 = vmatprep.subr.bf16.mxu0 0
    %929 = vmatpush1.bf16.xpose.msra.mxu0 0
    %930 = vmatprep.subr.bf16.mxu0 0
    %931 = vmatpush1.bf16.xpose.msra.mxu0 0
    %932 = vmatprep.subr.bf16.mxu0 0
    %933 = vmatpush1.bf16.xpose.msra.mxu0 0
    %934 = vmatprep.subr.bf16.mxu0 0
    %935 = vmatpush1.bf16.xpose.msra.mxu0 0
    %936 = vmatprep.subr.bf16.mxu0 0
    %937 = vmatpush1.bf16.xpose.msra.mxu0 0
    %938 = vmatprep.subr.bf16.mxu0 0
    %939 = vmatpush1.bf16.xpose.msra.mxu0 0
    %940 = vmatprep.subr.bf16.mxu0 0
    %941 = vmatpush1.bf16.xpose.msra.mxu0 0
    %942 = vmatprep.mubr.bf16.mxu0 0
    %943 = vmatmul.mubr.bf16.gmra.mrb[0].mxu0 %v905
    %v944 = vpop.f32.mrb[0].mxu0
    %v945 = vadd.f32 0.0, %v944
    %v946 = vpop.f32.mrb[0].mxu0
    %v947 = vpop.f32.mrb[0].mxu0
    %v948 = vpop.f32.mrb[0].mxu0
    %949 = vdwg.mxu0
    %v951 = vsel %vm811, %v806, 0
    %v954 = vsel %vm811, %v810, 0
    %956 = vmatprep.subr.bf16.mxu0 0
    %957 = vmatpush1.bf16.xpose.msra.mxu0 %v954
    %958 = vmatprep.subr.bf16.mxu0 0
    %959 = vmatpush1.bf16.xpose.msra.mxu0 0
    %960 = vmatprep.subr.bf16.mxu0 0
    %961 = vmatpush1.bf16.xpose.msra.mxu0 0
    %962 = vmatprep.subr.bf16.mxu0 0
    %963 = vmatpush1.bf16.xpose.msra.mxu0 0
    %964 = vmatprep.subr.bf16.mxu0 0
    %965 = vmatpush1.bf16.xpose.msra.mxu0 0
    %966 = vmatprep.subr.bf16.mxu0 0
    %967 = vmatpush1.bf16.xpose.msra.mxu0 0
    %968 = vmatprep.subr.bf16.mxu0 0
    %969 = vmatpush1.bf16.xpose.msra.mxu0 0
    %970 = vmatprep.subr.bf16.mxu0 0
    %971 = vmatpush1.bf16.xpose.msra.mxu0 0
    %972 = vmatprep.subr.bf16.mxu0 0
    %973 = vmatpush1.bf16.xpose.msra.mxu0 0
    %974 = vmatprep.subr.bf16.mxu0 0
    %975 = vmatpush1.bf16.xpose.msra.mxu0 0
    %976 = vmatprep.subr.bf16.mxu0 0
    %977 = vmatpush1.bf16.xpose.msra.mxu0 0
    %978 = vmatprep.subr.bf16.mxu0 0
    %979 = vmatpush1.bf16.xpose.msra.mxu0 0
    %980 = vmatprep.subr.bf16.mxu0 0
    %981 = vmatpush1.bf16.xpose.msra.mxu0 0
    %982 = vmatprep.subr.bf16.mxu0 0
    %983 = vmatpush1.bf16.xpose.msra.mxu0 0
    %984 = vmatprep.subr.bf16.mxu0 0
    %985 = vmatpush1.bf16.xpose.msra.mxu0 0
    %986 = vmatprep.subr.bf16.mxu0 0
    %987 = vmatpush1.bf16.xpose.msra.mxu0 0
    %988 = vmatprep.mubr.bf16.mxu0 0
    %989 = vmatmul.mubr.bf16.gmra.mrb[0].mxu0 %v951
    %v990 = vpop.f32.mrb[0].mxu0
    %v991 = vadd.f32 0.0, %v990
    %v992 = vpop.f32.mrb[0].mxu0
    %v993 = vpop.f32.mrb[0].mxu0
    %v994 = vpop.f32.mrb[0].mxu0
    %995 = vdwg.mxu0
    %v996 = vsel %vm811, %v853, -inf
    %997 = vmax.xlane.f32.xlu0 %v996
    %v998 = vpop.xlane.xlu0 %997
    %v999 = vsel %vm811, %v899, -inf
    %1000 = vmax.xlane.f32.xlu0 %v999
    %v1001 = vpop.xlane.xlu0 %1000
    %v1002 = vsel %vm811, %v945, -inf
    %1003 = vmax.xlane.f32.xlu0 %v1002
    %v1004 = vpop.xlane.xlu0 %1003
    %v1005 = vsel %vm811, %v991, -inf
    %1006 = vmax.xlane.f32.xlu0 %v1005
    %v1007 = vpop.xlane.xlu0 %1006
    %v1008 = vsub.f32 %v853, %v998
    %v1009 = vsub.f32 %v899, %v1001
    %v1010 = vsub.f32 %v945, %v1004
    %v1011 = vsub.f32 %v991, %v1007
    %v1012 = vmul.f32 %v1008, 1.442695
    %v1013 = vpow.pop %v1012
    %v1014 = vmul.f32 %v1009, 1.442695
    %v1015 = vpow.pop %v1014
    %v1016 = vmul.f32 %v1010, 1.442695
    %v1017 = vpow.pop %v1016
    %v1018 = vmul.f32 %v1011, 1.442695
    %v1019 = vpow.pop %v1018
    %v1020 = vsel %vm811, %v1013, 0.0
    %1021 = vadd.xlane.f32.xlu0 %v1020
    %v1022 = vpop.xlane.xlu0 %1021
    %v1023 = vsel %vm811, %v1015, 0.0
    %1024 = vadd.xlane.f32.xlu0 %v1023
    %v1025 = vpop.xlane.xlu0 %1024
    %v1026 = vsel %vm811, %v1017, 0.0
    %1027 = vadd.xlane.f32.xlu0 %v1026
    %v1028 = vpop.xlane.xlu0 %1027
    %v1029 = vsel %vm811, %v1019, 0.0
    %1030 = vadd.xlane.f32.xlu0 %v1029
    %v1031 = vpop.xlane.xlu0 %1030
    %v1032 = vrcp.pop %v1022
    %v1033 = vrcp.pop %v1025
    %v1034 = vrcp.pop %v1028
    %v1035 = vrcp.pop %v1031
    %v1036 = vmul.f32 %v1013, %v1032
    %v1037 = vmul.f32 %v1015, %v1033
    %v1038 = vmul.f32 %v1017, %v1034
    %v1039 = vmul.f32 %v1019, %v1035
    %v1040 = vpack.c.bf16 %v1036, %v1036
    %v1041 = vpack.c.bf16 %v1037, %v1037
    %v1042 = vpack.c.bf16 %v1038, %v1038
    %v1043 = vpack.c.bf16 %v1039, %v1039
    %v1044 = vpack.c.bf16 %v642, %v642
    %v1045 = vpack.c.bf16 %v694, %v694
    %v1046 = vpack.c.bf16 %v746, %v746
    %v1047 = vpack.c.bf16 %v798, %v798
    %v1049 = vsel %vm811, %v1040, 0
    %vm1051 = vcmask 1043456
    %v1053 = vsel %vm1051, %v1044, 0
    %1055 = vmatprep.subr.bf16.mxu0 0
    %1056 = vmatpush1.bf16.msra.mxu0 %v1053
    %1057 = vmatprep.subr.bf16.mxu0 0
    %1058 = vmatpush1.bf16.msra.mxu0 0
    %1059 = vmatprep.subr.bf16.mxu0 0
    %1060 = vmatpush1.bf16.msra.mxu0 0
    %1061 = vmatprep.subr.bf16.mxu0 0
    %1062 = vmatpush1.bf16.msra.mxu0 0
    %1063 = vmatprep.subr.bf16.mxu0 0
    %1064 = vmatpush1.bf16.msra.mxu0 0
    %1065 = vmatprep.subr.bf16.mxu0 0
    %1066 = vmatpush1.bf16.msra.mxu0 0
    %1067 = vmatprep.subr.bf16.mxu0 0
    %1068 = vmatpush1.bf16.msra.mxu0 0
    %1069 = vmatprep.subr.bf16.mxu0 0
    %1070 = vmatpush1.bf16.msra.mxu0 0
    %1071 = vmatprep.subr.bf16.mxu0 0
    %1072 = vmatpush1.bf16.msra.mxu0 0
    %1073 = vmatprep.subr.bf16.mxu0 0
    %1074 = vmatpush1.bf16.msra.mxu0 0
    %1075 = vmatprep.subr.bf16.mxu0 0
    %1076 = vmatpush1.bf16.msra.mxu0 0
    %1077 = vmatprep.subr.bf16.mxu0 0
    %1078 = vmatpush1.bf16.msra.mxu0 0
    %1079 = vmatprep.subr.bf16.mxu0 0
    %1080 = vmatpush1.bf16.msra.mxu0 0
    %1081 = vmatprep.subr.bf16.mxu0 0
    %1082 = vmatpush1.bf16.msra.mxu0 0
    %1083 = vmatprep.subr.bf16.mxu0 0
    %1084 = vmatpush1.bf16.msra.mxu0 0
    %1085 = vmatprep.subr.bf16.mxu0 0
    %1086 = vmatpush1.bf16.msra.mxu0 0
    %1087 = vmatprep.mubr.bf16.mxu0 0
    %1088 = vmatmul.mubr.bf16.gmra.mrb[0].mxu0 %v1049
    %v1089 = vpop.f32.mrb[0].mxu0
    %v1090 = vadd.f32 0.0, %v1089
    %v1091 = vpop.f32.mrb[0].mxu0
    %v1092 = vpop.f32.mrb[0].mxu0
    %v1093 = vpop.f32.mrb[0].mxu0
    %1094 = vdwg.mxu0
    %v1096 = vsel %vm811, %v1041, 0
    %v1099 = vsel %vm1051, %v1045, 0
    %1101 = vmatprep.subr.bf16.mxu0 0
    %1102 = vmatpush1.bf16.msra.mxu0 %v1099
    %1103 = vmatprep.subr.bf16.mxu0 0
    %1104 = vmatpush1.bf16.msra.mxu0 0
    %1105 = vmatprep.subr.bf16.mxu0 0
    %1106 = vmatpush1.bf16.msra.mxu0 0
    %1107 = vmatprep.subr.bf16.mxu0 0
    %1108 = vmatpush1.bf16.msra.mxu0 0
    %1109 = vmatprep.subr.bf16.mxu0 0
    %1110 = vmatpush1.bf16.msra.mxu0 0
    %1111 = vmatprep.subr.bf16.mxu0 0
    %1112 = vmatpush1.bf16.msra.mxu0 0
    %1113 = vmatprep.subr.bf16.mxu0 0
    %1114 = vmatpush1.bf16.msra.mxu0 0
    %1115 = vmatprep.subr.bf16.mxu0 0
    %1116 = vmatpush1.bf16.msra.mxu0 0
    %1117 = vmatprep.subr.bf16.mxu0 0
    %1118 = vmatpush1.bf16.msra.mxu0 0
    %1119 = vmatprep.subr.bf16.mxu0 0
    %1120 = vmatpush1.bf16.msra.mxu0 0
    %1121 = vmatprep.subr.bf16.mxu0 0
    %1122 = vmatpush1.bf16.msra.mxu0 0
    %1123 = vmatprep.subr.bf16.mxu0 0
    %1124 = vmatpush1.bf16.msra.mxu0 0
    %1125 = vmatprep.subr.bf16.mxu0 0
    %1126 = vmatpush1.bf16.msra.mxu0 0
    %1127 = vmatprep.subr.bf16.mxu0 0
    %1128 = vmatpush1.bf16.msra.mxu0 0
    %1129 = vmatprep.subr.bf16.mxu0 0
    %1130 = vmatpush1.bf16.msra.mxu0 0
    %1131 = vmatprep.subr.bf16.mxu0 0
    %1132 = vmatpush1.bf16.msra.mxu0 0
    %1133 = vmatprep.mubr.bf16.mxu0 0
    %1134 = vmatmul.mubr.bf16.gmra.mrb[0].mxu0 %v1096
    %v1135 = vpop.f32.mrb[0].mxu0
    %v1136 = vadd.f32 0.0, %v1135
    %v1137 = vpop.f32.mrb[0].mxu0
    %v1138 = vpop.f32.mrb[0].mxu0
    %v1139 = vpop.f32.mrb[0].mxu0
    %1140 = vdwg.mxu0
    %v1142 = vsel %vm811, %v1042, 0
    %v1145 = vsel %vm1051, %v1046, 0
    %1147 = vmatprep.subr.bf16.mxu0 0
    %1148 = vmatpush1.bf16.msra.mxu0 %v1145
    %1149 = vmatprep.subr.bf16.mxu0 0
    %1150 = vmatpush1.bf16.msra.mxu0 0
    %1151 = vmatprep.subr.bf16.mxu0 0
    %1152 = vmatpush1.bf16.msra.mxu0 0
    %1153 = vmatprep.subr.bf16.mxu0 0
    %1154 = vmatpush1.bf16.msra.mxu0 0
    %1155 = vmatprep.subr.bf16.mxu0 0
    %1156 = vmatpush1.bf16.msra.mxu0 0
    %1157 = vmatprep.subr.bf16.mxu0 0
    %1158 = vmatpush1.bf16.msra.mxu0 0
    %1159 = vmatprep.subr.bf16.mxu0 0
    %1160 = vmatpush1.bf16.msra.mxu0 0
    %1161 = vmatprep.subr.bf16.mxu0 0
    %1162 = vmatpush1.bf16.msra.mxu0 0
    %1163 = vmatprep.subr.bf16.mxu0 0
    %1164 = vmatpush1.bf16.msra.mxu0 0
    %1165 = vmatprep.subr.bf16.mxu0 0
    %1166 = vmatpush1.bf16.msra.mxu0 0
    %1167 = vmatprep.subr.bf16.mxu0 0
    %1168 = vmatpush1.bf16.msra.mxu0 0
    %1169 = vmatprep.subr.bf16.mxu0 0
    %1170 = vmatpush1.bf16.msra.mxu0 0
    %1171 = vmatprep.subr.bf16.mxu0 0
    %1172 = vmatpush1.bf16.msra.mxu0 0
    %1173 = vmatprep.subr.bf16.mxu0 0
    %1174 = vmatpush1.bf16.msra.mxu0 0
    %1175 = vmatprep.subr.bf16.mxu0 0
    %1176 = vmatpush1.bf16.msra.mxu0 0
    %1177 = vmatprep.subr.bf16.mxu0 0
    %1178 = vmatpush1.bf16.msra.mxu0 0
    %1179 = vmatprep.mubr.bf16.mxu0 0
    %1180 = vmatmul.mubr.bf16.gmra.mrb[0].mxu0 %v1142
    %v1181 = vpop.f32.mrb[0].mxu0
    %v1182 = vadd.f32 0.0, %v1181
    %v1183 = vpop.f32.mrb[0].mxu0
    %v1184 = vpop.f32.mrb[0].mxu0
    %v1185 = vpop.f32.mrb[0].mxu0
    %1186 = vdwg.mxu0
    %v1188 = vsel %vm811, %v1043, 0
    %v1191 = vsel %vm1051, %v1047, 0
    %1193 = vmatprep.subr.bf16.mxu0 0
    %1194 = vmatpush1.bf16.msra.mxu0 %v1191
    %1195 = vmatprep.subr.bf16.mxu0 0
    %1196 = vmatpush1.bf16.msra.mxu0 0
    %1197 = vmatprep.subr.bf16.mxu0 0
    %1198 = vmatpush1.bf16.msra.mxu0 0
    %1199 = vmatprep.subr.bf16.mxu0 0
    %1200 = vmatpush1.bf16.msra.mxu0 0
    %1201 = vmatprep.subr.bf16.mxu0 0
    %1202 = vmatpush1.bf16.msra.mxu0 0
    %1203 = vmatprep.subr.bf16.mxu0 0
    %1204 = vmatpush1.bf16.msra.mxu0 0
    %1205 = vmatprep.subr.bf16.mxu0 0
    %1206 = vmatpush1.bf16.msra.mxu0 0
    %1207 = vmatprep.subr.bf16.mxu0 0
    %1208 = vmatpush1.bf16.msra.mxu0 0
    %1209 = vmatprep.subr.bf16.mxu0 0
    %1210 = vmatpush1.bf16.msra.mxu0 0
    %1211 = vmatprep.subr.bf16.mxu0 0
    %1212 = vmatpush1.bf16.msra.mxu0 0
    %1213 = vmatprep.subr.bf16.mxu0 0
    %1214 = vmatpush1.bf16.msra.mxu0 0
    %1215 = vmatprep.subr.bf16.mxu0 0
    %1216 = vmatpush1.bf16.msra.mxu0 0
    %1217 = vmatprep.subr.bf16.mxu0 0
    %1218 = vmatpush1.bf16.msra.mxu0 0
    %1219 = vmatprep.subr.bf16.mxu0 0
    %1220 = vmatpush1.bf16.msra.mxu0 0
    %1221 = vmatprep.subr.bf16.mxu0 0
    %1222 = vmatpush1.bf16.msra.mxu0 0
    %1223 = vmatprep.subr.bf16.mxu0 0
    %1224 = vmatpush1.bf16.msra.mxu0 0
    %1225 = vmatprep.mubr.bf16.mxu0 0
    %1226 = vmatmul.mubr.bf16.gmra.mrb[0].mxu0 %v1188
    %v1227 = vpop.f32.mrb[0].mxu0
    %v1228 = vadd.f32 0.0, %v1227
    %v1229 = vpop.f32.mrb[0].mxu0
    %v1230 = vpop.f32.mrb[0].mxu0
    %v1231 = vpop.f32.mrb[0].mxu0
    %1232 = vdwg.mxu0
    %v1233 = vpack.c.bf16 %v1090, %v1090
    %v1234 = vpack.c.bf16 %v1136, %v1136
    %v1235 = vpack.c.bf16 %v1182, %v1182
    %v1236 = vpack.c.bf16 %v1228, %v1228
    %v1238 = vsel %vm811, %v1233, 0
    %v1241 = vsel %vm1051, %v85, 0
    %1243 = vmatprep.subr.bf16.mxu0 0
    %1244 = vmatpush1.bf16.msra.mxu0 %v1241
    %1245 = vmatprep.subr.bf16.mxu0 0
    %1246 = vmatpush1.bf16.msra.mxu0 0
    %1247 = vmatprep.subr.bf16.mxu0 0
    %1248 = vmatpush1.bf16.msra.mxu0 0
    %1249 = vmatprep.subr.bf16.mxu0 0
    %1250 = vmatpush1.bf16.msra.mxu0 0
    %1251 = vmatprep.subr.bf16.mxu0 0
    %1252 = vmatpush1.bf16.msra.mxu0 0
    %1253 = vmatprep.subr.bf16.mxu0 0
    %1254 = vmatpush1.bf16.msra.mxu0 0
    %1255 = vmatprep.subr.bf16.mxu0 0
    %1256 = vmatpush1.bf16.msra.mxu0 0
    %1257 = vmatprep.subr.bf16.mxu0 0
    %1258 = vmatpush1.bf16.msra.mxu0 0
    %1259 = vmatprep.subr.bf16.mxu0 0
    %1260 = vmatpush1.bf16.msra.mxu0 0
    %1261 = vmatprep.subr.bf16.mxu0 0
    %1262 = vmatpush1.bf16.msra.mxu0 0
    %1263 = vmatprep.subr.bf16.mxu0 0
    %1264 = vmatpush1.bf16.msra.mxu0 0
    %1265 = vmatprep.subr.bf16.mxu0 0
    %1266 = vmatpush1.bf16.msra.mxu0 0
    %1267 = vmatprep.subr.bf16.mxu0 0
    %1268 = vmatpush1.bf16.msra.mxu0 0
    %1269 = vmatprep.subr.bf16.mxu0 0
    %1270 = vmatpush1.bf16.msra.mxu0 0
    %1271 = vmatprep.subr.bf16.mxu0 0
    %1272 = vmatpush1.bf16.msra.mxu0 0
    %1273 = vmatprep.subr.bf16.mxu0 0
    %1274 = vmatpush1.bf16.msra.mxu0 0
    %1275 = vmatprep.mubr.bf16.mxu0 0
    %1276 = vmatmul.mubr.bf16.gmra.mrb[0].mxu0 %v1238
    %v1277 = vpop.f32.mrb[0].mxu0
    %v1278 = vadd.f32 0.0, %v1277
    %v1279 = vpop.f32.mrb[0].mxu0
    %v1280 = vpop.f32.mrb[0].mxu0
    %v1281 = vpop.f32.mrb[0].mxu0
    %1282 = vdwg.mxu0
    %v1284 = vsel %vm811, %v1234, 0
    %v1287 = vsel %vm1051, %v86, 0
    %1289 = vmatprep.subr.bf16.mxu0 0
    %1290 = vmatpush1.bf16.msra.mxu0 %v1287
    %1291 = vmatprep.subr.bf16.mxu0 0
    %1292 = vmatpush1.bf16.msra.mxu0 0
    %1293 = vmatprep.subr.bf16.mxu0 0
    %1294 = vmatpush1.bf16.msra.mxu0 0
    %1295 = vmatprep.subr.bf16.mxu0 0
    %1296 = vmatpush1.bf16.msra.mxu0 0
    %1297 = vmatprep.subr.bf16.mxu0 0
    %1298 = vmatpush1.bf16.msra.mxu0 0
    %1299 = vmatprep.subr.bf16.mxu0 0
    %1300 = vmatpush1.bf16.msra.mxu0 0
    %1301 = vmatprep.subr.bf16.mxu0 0
    %1302 = vmatpush1.bf16.msra.mxu0 0
    %1303 = vmatprep.subr.bf16.mxu0 0
    %1304 = vmatpush1.bf16.msra.mxu0 0
    %1305 = vmatprep.subr.bf16.mxu0 0
    %1306 = vmatpush1.bf16.msra.mxu0 0
    %1307 = vmatprep.subr.bf16.mxu0 0
    %1308 = vmatpush1.bf16.msra.mxu0 0
    %1309 = vmatprep.subr.bf16.mxu0 0
    %1310 = vmatpush1.bf16.msra.mxu0 0
    %1311 = vmatprep.subr.bf16.mxu0 0
    %1312 = vmatpush1.bf16.msra.mxu0 0
    %1313 = vmatprep.subr.bf16.mxu0 0
    %1314 = vmatpush1.bf16.msra.mxu0 0
    %1315 = vmatprep.subr.bf16.mxu0 0
    %1316 = vmatpush1.bf16.msra.mxu0 0
    %1317 = vmatprep.subr.bf16.mxu0 0
    %1318 = vmatpush1.bf16.msra.mxu0 0
    %1319 = vmatprep.subr.bf16.mxu0 0
    %1320 = vmatpush1.bf16.msra.mxu0 0
    %1321 = vmatprep.mubr.bf16.mxu0 0
    %1322 = vmatmul.mubr.bf16.gmra.mrb[0].mxu0 %v1284
    %v1323 = vpop.f32.mrb[0].mxu0
    %v1324 = vadd.f32 0.0, %v1323
    %v1325 = vpop.f32.mrb[0].mxu0
    %v1326 = vpop.f32.mrb[0].mxu0
    %v1327 = vpop.f32.mrb[0].mxu0
    %1328 = vdwg.mxu0
    %v1330 = vsel %vm811, %v1235, 0
    %v1333 = vsel %vm1051, %v87, 0
    %1335 = vmatprep.subr.bf16.mxu0 0
    %1336 = vmatpush1.bf16.msra.mxu0 %v1333
    %1337 = vmatprep.subr.bf16.mxu0 0
    %1338 = vmatpush1.bf16.msra.mxu0 0
    %1339 = vmatprep.subr.bf16.mxu0 0
    %1340 = vmatpush1.bf16.msra.mxu0 0
    %1341 = vmatprep.subr.bf16.mxu0 0
    %1342 = vmatpush1.bf16.msra.mxu0 0
    %1343 = vmatprep.subr.bf16.mxu0 0
    %1344 = vmatpush1.bf16.msra.mxu0 0
    %1345 = vmatprep.subr.bf16.mxu0 0
    %1346 = vmatpush1.bf16.msra.mxu0 0
    %1347 = vmatprep.subr.bf16.mxu0 0
    %1348 = vmatpush1.bf16.msra.mxu0 0
    %1349 = vmatprep.subr.bf16.mxu0 0
    %1350 = vmatpush1.bf16.msra.mxu0 0
    %1351 = vmatprep.subr.bf16.mxu0 0
    %1352 = vmatpush1.bf16.msra.mxu0 0
    %1353 = vmatprep.subr.bf16.mxu0 0
    %1354 = vmatpush1.bf16.msra.mxu0 0
    %1355 = vmatprep.subr.bf16.mxu0 0
    %1356 = vmatpush1.bf16.msra.mxu0 0
    %1357 = vmatprep.subr.bf16.mxu0 0
    %1358 = vmatpush1.bf16.msra.mxu0 0
    %1359 = vmatprep.subr.bf16.mxu0 0
    %1360 = vmatpush1.bf16.msra.mxu0 0
    %1361 = vmatprep.subr.bf16.mxu0 0
    %1362 = vmatpush1.bf16.msra.mxu0 0
    %1363 = vmatprep.subr.bf16.mxu0 0
    %1364 = vmatpush1.bf16.msra.mxu0 0
    %1365 = vmatprep.subr.bf16.mxu0 0
    %1366 = vmatpush1.bf16.msra.mxu0 0
    %1367 = vmatprep.mubr.bf16.mxu0 0
    %1368 = vmatmul.mubr.bf16.gmra.mrb[0].mxu0 %v1330
    %v1369 = vpop.f32.mrb[0].mxu0
    %v1370 = vadd.f32 0.0, %v1369
    %v1371 = vpop.f32.mrb[0].mxu0
    %v1372 = vpop.f32.mrb[0].mxu0
    %v1373 = vpop.f32.mrb[0].mxu0
    %1374 = vdwg.mxu0
    %v1376 = vsel %vm811, %v1236, 0
    %v1379 = vsel %vm1051, %v88, 0
    %1381 = vmatprep.subr.bf16.mxu0 0
    %1382 = vmatpush1.bf16.msra.mxu0 %v1379
    %1383 = vmatprep.subr.bf16.mxu0 0
    %1384 = vmatpush1.bf16.msra.mxu0 0
    %1385 = vmatprep.subr.bf16.mxu0 0
    %1386 = vmatpush1.bf16.msra.mxu0 0
    %1387 = vmatprep.subr.bf16.mxu0 0
    %1388 = vmatpush1.bf16.msra.mxu0 0
    %1389 = vmatprep.subr.bf16.mxu0 0
    %1390 = vmatpush1.bf16.msra.mxu0 0
    %1391 = vmatprep.subr.bf16.mxu0 0
    %1392 = vmatpush1.bf16.msra.mxu0 0
    %1393 = vmatprep.subr.bf16.mxu0 0
    %1394 = vmatpush1.bf16.msra.mxu0 0
    %1395 = vmatprep.subr.bf16.mxu0 0
    %1396 = vmatpush1.bf16.msra.mxu0 0
    %1397 = vmatprep.subr.bf16.mxu0 0
    %1398 = vmatpush1.bf16.msra.mxu0 0
    %1399 = vmatprep.subr.bf16.mxu0 0
    %1400 = vmatpush1.bf16.msra.mxu0 0
    %1401 = vmatprep.subr.bf16.mxu0 0
    %1402 = vmatpush1.bf16.msra.mxu0 0
    %1403 = vmatprep.subr.bf16.mxu0 0
    %1404 = vmatpush1.bf16.msra.mxu0 0
    %1405 = vmatprep.subr.bf16.mxu0 0
    %1406 = vmatpush1.bf16.msra.mxu0 0
    %1407 = vmatprep.subr.bf16.mxu0 0
    %1408 = vmatpush1.bf16.msra.mxu0 0
    %1409 = vmatprep.subr.bf16.mxu0 0
    %1410 = vmatpush1.bf16.msra.mxu0 0
    %1411 = vmatprep.subr.bf16.mxu0 0
    %1412 = vmatpush1.bf16.msra.mxu0 0
    %1413 = vmatprep.mubr.bf16.mxu0 0
    %1414 = vmatmul.mubr.bf16.gmra.mrb[0].mxu0 %v1376
    %v1415 = vpop.f32.mrb[0].mxu0
    %v1416 = vadd.f32 0.0, %v1415
    %v1417 = vpop.f32.mrb[0].mxu0
    %v1418 = vpop.f32.mrb[0].mxu0
    %v1419 = vpop.f32.mrb[0].mxu0
    %1420 = vdwg.mxu0
    %v1421 = vsel %vm139, %v1278, 0.0
    %v1422 = vsel %vm139, %v1324, 0.0
    %v1423 = vadd.f32 %v1421, %v1422
    %v1424 = vsel %vm139, %v1370, 0.0
    %v1425 = vadd.f32 %v1423, %v1424
    %v1426 = vsel %vm139, %v1416, 0.0
    %v1427 = vadd.f32 %v1425, %v1426
    %v1429 = vlaneseq
    %v1430 = vshrl.u32 %v1429, 7
    %v1431 = vsub.s32 0, %v1430
    %v1432 = vrot.slane %v101, %v1431
    %v1434 = vadd.f32 %v1427, %v1432
    %1435 = vst.msk [vmem:[#allocation2] sm:$0xff] %vm139, %v1434
    %v1436 = vsel %vm811, %v1036, 0.0
    %v1437 = vsel %vm811, %v1037, 0.0
    %v1438 = vadd.f32 %v1436, %v1437
    %v1439 = vsel %vm811, %v1038, 0.0
    %v1440 = vadd.f32 %v1438, %v1439
    %v1441 = vsel %vm811, %v1039, 0.0
    %v1442 = vadd.f32 %v1440, %v1441
    %v1443 = vrcp.pop 4.0
    %v1444 = vmul.f32 %v1442, %v1443
    %1445 = vst.msk [vmem:[#allocation4] sm:$0xff] %vm811, %v1444
    %s1446 = scalar_lea.vmem %s0, 4
    %v1447 = vld [vmem:[%s1446] sm:$0xf]
    %v1449 = vsel %vm139, %v1447, 0
    %1451 = vmatprep.subr.bf16.mxu0 0
    %1452 = vmatpush1.bf16.msra.mxu0 %v135
    %1453 = vmatprep.subr.bf16.mxu0 0
    %1454 = vmatpush1.bf16.msra.mxu0 %v136
    %1455 = vmatprep.subr.bf16.mxu0 0
    %1456 = vmatpush1.bf16.msra.mxu0 0
    %1457 = vmatprep.subr.bf16.mxu0 0
    %1458 = vmatpush1.bf16.msra.mxu0 0
    %1459 = vmatprep.subr.bf16.mxu0 0
    %1460 = vmatpush1.bf16.msra.mxu0 0
    %1461 = vmatprep.subr.bf16.mxu0 0
    %1462 = vmatpush1.bf16.msra.mxu0 0
    %1463 = vmatprep.subr.bf16.mxu0 0
    %1464 = vmatpush1.bf16.msra.mxu0 0
    %1465 = vmatprep.subr.bf16.mxu0 0
    %1466 = vmatpush1.bf16.msra.mxu0 0
    %1467 = vmatprep.subr.bf16.mxu0 0
    %1468 = vmatpush1.bf16.msra.mxu0 0
    %1469 = vmatprep.subr.bf16.mxu0 0
    %1470 = vmatpush1.bf16.msra.mxu0 0
    %1471 = vmatprep.subr.bf16.mxu0 0
    %1472 = vmatpush1.bf16.msra.mxu0 0
    %1473 = vmatprep.subr.bf16.mxu0 0
    %1474 = vmatpush1.bf16.msra.mxu0 0
    %1475 = vmatprep.subr.bf16.mxu0 0
    %1476 = vmatpush1.bf16.msra.mxu0 0
    %1477 = vmatprep.subr.bf16.mxu0 0
    %1478 = vmatpush1.bf16.msra.mxu0 0
    %1479 = vmatprep.subr.bf16.mxu0 0
    %1480 = vmatpush1.bf16.msra.mxu0 0
    %1481 = vmatprep.subr.bf16.mxu0 0
    %1482 = vmatpush1.bf16.msra.mxu0 0
    %1483 = vmatprep.mubr.bf16.mxu0 0
    %1484 = vmatmul.mubr.bf16.gmra.mrb[0].mxu0 %v1449
    %v1485 = vpop.f32.mrb[0].mxu0
    %v1486 = vadd.f32 %v110, %v1485
    %v1487 = vpop.f32.mrb[0].mxu0
    %v1488 = vpop.f32.mrb[0].mxu0
    %v1489 = vpop.f32.mrb[0].mxu0
    %1490 = vdwg.mxu0
    %1491 = vmatprep.subr.bf16.mxu0 0
    %1492 = vmatpush1.bf16.msra.mxu0 %v191
    %1493 = vmatprep.subr.bf16.mxu0 0
    %1494 = vmatpush1.bf16.msra.mxu0 %v192
    %1495 = vmatprep.subr.bf16.mxu0 0
    %1496 = vmatpush1.bf16.msra.mxu0 0
    %1497 = vmatprep.subr.bf16.mxu0 0
    %1498 = vmatpush1.bf16.msra.mxu0 0
    %1499 = vmatprep.subr.bf16.mxu0 0
    %1500 = vmatpush1.bf16.msra.mxu0 0
    %1501 = vmatprep.subr.bf16.mxu0 0
    %1502 = vmatpush1.bf16.msra.mxu0 0
    %1503 = vmatprep.subr.bf16.mxu0 0
    %1504 = vmatpush1.bf16.msra.mxu0 0
    %1505 = vmatprep.subr.bf16.mxu0 0
    %1506 = vmatpush1.bf16.msra.mxu0 0
    %1507 = vmatprep.subr.bf16.mxu0 0
    %1508 = vmatpush1.bf16.msra.mxu0 0
    %1509 = vmatprep.subr.bf16.mxu0 0
    %1510 = vmatpush1.bf16.msra.mxu0 0
    %1511 = vmatprep.subr.bf16.mxu0 0
    %1512 = vmatpush1.bf16.msra.mxu0 0
    %1513 = vmatprep.subr.bf16.mxu0 0
    %1514 = vmatpush1.bf16.msra.mxu0 0
    %1515 = vmatprep.subr.bf16.mxu0 0
    %1516 = vmatpush1.bf16.msra.mxu0 0
    %1517 = vmatprep.subr.bf16.mxu0 0
    %1518 = vmatpush1.bf16.msra.mxu0 0
    %1519 = vmatprep.subr.bf16.mxu0 0
    %1520 = vmatpush1.bf16.msra.mxu0 0
    %1521 = vmatprep.subr.bf16.mxu0 0
    %1522 = vmatpush1.bf16.msra.mxu0 0
    %1523 = vmatprep.mubr.bf16.mxu0 0
    %1524 = vmatmul.mubr.bf16.gmra.mrb[0].mxu0 %v1449
    %v1525 = vpop.f32.mrb[0].mxu0
    %v1526 = vadd.f32 %v114, %v1525
    %v1527 = vpop.f32.mrb[0].mxu0
    %v1528 = vpop.f32.mrb[0].mxu0
    %v1529 = vpop.f32.mrb[0].mxu0
    %1530 = vdwg.mxu0
    %1531 = vmatprep.subr.bf16.mxu0 0
    %1532 = vmatpush1.bf16.msra.mxu0 %v243
    %1533 = vmatprep.subr.bf16.mxu0 0
    %1534 = vmatpush1.bf16.msra.mxu0 %v244
    %1535 = vmatprep.subr.bf16.mxu0 0
    %1536 = vmatpush1.bf16.msra.mxu0 0
    %1537 = vmatprep.subr.bf16.mxu0 0
    %1538 = vmatpush1.bf16.msra.mxu0 0
    %1539 = vmatprep.subr.bf16.mxu0 0
    %1540 = vmatpush1.bf16.msra.mxu0 0
    %1541 = vmatprep.subr.bf16.mxu0 0
    %1542 = vmatpush1.bf16.msra.mxu0 0
    %1543 = vmatprep.subr.bf16.mxu0 0
    %1544 = vmatpush1.bf16.msra.mxu0 0
    %1545 = vmatprep.subr.bf16.mxu0 0
    %1546 = vmatpush1.bf16.msra.mxu0 0
    %1547 = vmatprep.subr.bf16.mxu0 0
    %1548 = vmatpush1.bf16.msra.mxu0 0
    %1549 = vmatprep.subr.bf16.mxu0 0
    %1550 = vmatpush1.bf16.msra.mxu0 0
    %1551 = vmatprep.subr.bf16.mxu0 0
    %1552 = vmatpush1.bf16.msra.mxu0 0
    %1553 = vmatprep.subr.bf16.mxu0 0
    %1554 = vmatpush1.bf16.msra.mxu0 0
    %1555 = vmatprep.subr.bf16.mxu0 0
    %1556 = vmatpush1.bf16.msra.mxu0 0
    %1557 = vmatprep.subr.bf16.mxu0 0
    %1558 = vmatpush1.bf16.msra.mxu0 0
    %1559 = vmatprep.subr.bf16.mxu0 0
    %1560 = vmatpush1.bf16.msra.mxu0 0
    %1561 = vmatprep.subr.bf16.mxu0 0
    %1562 = vmatpush1.bf16.msra.mxu0 0
    %1563 = vmatprep.mubr.bf16.mxu0 0
    %1564 = vmatmul.mubr.bf16.gmra.mrb[0].mxu0 %v1449
    %v1565 = vpop.f32.mrb[0].mxu0
    %v1566 = vadd.f32 %v118, %v1565
    %v1567 = vpop.f32.mrb[0].mxu0
    %v1568 = vpop.f32.mrb[0].mxu0
    %v1569 = vpop.f32.mrb[0].mxu0
    %1570 = vdwg.mxu0
    %1571 = vmatprep.subr.bf16.mxu0 0
    %1572 = vmatpush1.bf16.msra.mxu0 %v295
    %1573 = vmatprep.subr.bf16.mxu0 0
    %1574 = vmatpush1.bf16.msra.mxu0 %v296
    %1575 = vmatprep.subr.bf16.mxu0 0
    %1576 = vmatpush1.bf16.msra.mxu0 0
    %1577 = vmatprep.subr.bf16.mxu0 0
    %1578 = vmatpush1.bf16.msra.mxu0 0
    %1579 = vmatprep.subr.bf16.mxu0 0
    %1580 = vmatpush1.bf16.msra.mxu0 0
    %1581 = vmatprep.subr.bf16.mxu0 0
    %1582 = vmatpush1.bf16.msra.mxu0 0
    %1583 = vmatprep.subr.bf16.mxu0 0
    %1584 = vmatpush1.bf16.msra.mxu0 0
    %1585 = vmatprep.subr.bf16.mxu0 0
    %1586 = vmatpush1.bf16.msra.mxu0 0
    %1587 = vmatprep.subr.bf16.mxu0 0
    %1588 = vmatpush1.bf16.msra.mxu0 0
    %1589 = vmatprep.subr.bf16.mxu0 0
    %1590 = vmatpush1.bf16.msra.mxu0 0
    %1591 = vmatprep.subr.bf16.mxu0 0
    %1592 = vmatpush1.bf16.msra.mxu0 0
    %1593 = vmatprep.subr.bf16.mxu0 0
    %1594 = vmatpush1.bf16.msra.mxu0 0
    %1595 = vmatprep.subr.bf16.mxu0 0
    %1596 = vmatpush1.bf16.msra.mxu0 0
    %1597 = vmatprep.subr.bf16.mxu0 0
    %1598 = vmatpush1.bf16.msra.mxu0 0
    %1599 = vmatprep.subr.bf16.mxu0 0
    %1600 = vmatpush1.bf16.msra.mxu0 0
    %1601 = vmatprep.subr.bf16.mxu0 0
    %1602 = vmatpush1.bf16.msra.mxu0 0
    %1603 = vmatprep.mubr.bf16.mxu0 0
    %1604 = vmatmul.mubr.bf16.gmra.mrb[0].mxu0 %v1449
    %v1605 = vpop.f32.mrb[0].mxu0
    %v1606 = vadd.f32 %v122, %v1605
    %v1607 = vpop.f32.mrb[0].mxu0
    %v1608 = vpop.f32.mrb[0].mxu0
    %v1609 = vpop.f32.mrb[0].mxu0
    %1610 = vdwg.mxu0
    %1611 = vmatprep.subr.bf16.mxu0 0
    %1612 = vmatpush1.bf16.msra.mxu0 %v371
    %1613 = vmatprep.subr.bf16.mxu0 0
    %1614 = vmatpush1.bf16.msra.mxu0 %v372
    %1615 = vmatprep.subr.bf16.mxu0 0
    %1616 = vmatpush1.bf16.msra.mxu0 0
    %1617 = vmatprep.subr.bf16.mxu0 0
    %1618 = vmatpush1.bf16.msra.mxu0 0
    %1619 = vmatprep.subr.bf16.mxu0 0
    %1620 = vmatpush1.bf16.msra.mxu0 0
    %1621 = vmatprep.subr.bf16.mxu0 0
    %1622 = vmatpush1.bf16.msra.mxu0 0
    %1623 = vmatprep.subr.bf16.mxu0 0
    %1624 = vmatpush1.bf16.msra.mxu0 0
    %1625 = vmatprep.subr.bf16.mxu0 0
    %1626 = vmatpush1.bf16.msra.mxu0 0
    %1627 = vmatprep.subr.bf16.mxu0 0
    %1628 = vmatpush1.bf16.msra.mxu0 0
    %1629 = vmatprep.subr.bf16.mxu0 0
    %1630 = vmatpush1.bf16.msra.mxu0 0
    %1631 = vmatprep.subr.bf16.mxu0 0
    %1632 = vmatpush1.bf16.msra.mxu0 0
    %1633 = vmatprep.subr.bf16.mxu0 0
    %1634 = vmatpush1.bf16.msra.mxu0 0
    %1635 = vmatprep.subr.bf16.mxu0 0
    %1636 = vmatpush1.bf16.msra.mxu0 0
    %1637 = vmatprep.subr.bf16.mxu0 0
    %1638 = vmatpush1.bf16.msra.mxu0 0
    %1639 = vmatprep.subr.bf16.mxu0 0
    %1640 = vmatpush1.bf16.msra.mxu0 0
    %1641 = vmatprep.subr.bf16.mxu0 0
    %1642 = vmatpush1.bf16.msra.mxu0 0
    %1643 = vmatprep.mubr.bf16.mxu0 0
    %1644 = vmatmul.mubr.bf16.gmra.mrb[0].mxu0 %v1449
    %v1645 = vpop.f32.mrb[0].mxu0
    %v1646 = vadd.f32 %v346, %v1645
    %v1647 = vpop.f32.mrb[0].mxu0
    %v1648 = vpop.f32.mrb[0].mxu0
    %v1649 = vpop.f32.mrb[0].mxu0
    %1650 = vdwg.mxu0
    %1651 = vmatprep.subr.bf16.mxu0 0
    %1652 = vmatpush1.bf16.msra.mxu0 %v423
    %1653 = vmatprep.subr.bf16.mxu0 0
    %1654 = vmatpush1.bf16.msra.mxu0 %v424
    %1655 = vmatprep.subr.bf16.mxu0 0
    %1656 = vmatpush1.bf16.msra.mxu0 0
    %1657 = vmatprep.subr.bf16.mxu0 0
    %1658 = vmatpush1.bf16.msra.mxu0 0
    %1659 = vmatprep.subr.bf16.mxu0 0
    %1660 = vmatpush1.bf16.msra.mxu0 0
    %1661 = vmatprep.subr.bf16.mxu0 0
    %1662 = vmatpush1.bf16.msra.mxu0 0
    %1663 = vmatprep.subr.bf16.mxu0 0
    %1664 = vmatpush1.bf16.msra.mxu0 0
    %1665 = vmatprep.subr.bf16.mxu0 0
    %1666 = vmatpush1.bf16.msra.mxu0 0
    %1667 = vmatprep.subr.bf16.mxu0 0
    %1668 = vmatpush1.bf16.msra.mxu0 0
    %1669 = vmatprep.subr.bf16.mxu0 0
    %1670 = vmatpush1.bf16.msra.mxu0 0
    %1671 = vmatprep.subr.bf16.mxu0 0
    %1672 = vmatpush1.bf16.msra.mxu0 0
    %1673 = vmatprep.subr.bf16.mxu0 0
    %1674 = vmatpush1.bf16.msra.mxu0 0
    %1675 = vmatprep.subr.bf16.mxu0 0
    %1676 = vmatpush1.bf16.msra.mxu0 0
    %1677 = vmatprep.subr.bf16.mxu0 0
    %1678 = vmatpush1.bf16.msra.mxu0 0
    %1679 = vmatprep.subr.bf16.mxu0 0
    %1680 = vmatpush1.bf16.msra.mxu0 0
    %1681 = vmatprep.subr.bf16.mxu0 0
    %1682 = vmatpush1.bf16.msra.mxu0 0
    %1683 = vmatprep.mubr.bf16.mxu0 0
    %1684 = vmatmul.mubr.bf16.gmra.mrb[0].mxu0 %v1449
    %v1685 = vpop.f32.mrb[0].mxu0
    %v1686 = vadd.f32 %v350, %v1685
    %v1687 = vpop.f32.mrb[0].mxu0
    %v1688 = vpop.f32.mrb[0].mxu0
    %v1689 = vpop.f32.mrb[0].mxu0
    %1690 = vdwg.mxu0
    %1691 = vmatprep.subr.bf16.mxu0 0
    %1692 = vmatpush1.bf16.msra.mxu0 %v475
    %1693 = vmatprep.subr.bf16.mxu0 0
    %1694 = vmatpush1.bf16.msra.mxu0 %v476
    %1695 = vmatprep.subr.bf16.mxu0 0
    %1696 = vmatpush1.bf16.msra.mxu0 0
    %1697 = vmatprep.subr.bf16.mxu0 0
    %1698 = vmatpush1.bf16.msra.mxu0 0
    %1699 = vmatprep.subr.bf16.mxu0 0
    %1700 = vmatpush1.bf16.msra.mxu0 0
    %1701 = vmatprep.subr.bf16.mxu0 0
    %1702 = vmatpush1.bf16.msra.mxu0 0
    %1703 = vmatprep.subr.bf16.mxu0 0
    %1704 = vmatpush1.bf16.msra.mxu0 0
    %1705 = vmatprep.subr.bf16.mxu0 0
    %1706 = vmatpush1.bf16.msra.mxu0 0
    %1707 = vmatprep.subr.bf16.mxu0 0
    %1708 = vmatpush1.bf16.msra.mxu0 0
    %1709 = vmatprep.subr.bf16.mxu0 0
    %1710 = vmatpush1.bf16.msra.mxu0 0
    %1711 = vmatprep.subr.bf16.mxu0 0
    %1712 = vmatpush1.bf16.msra.mxu0 0
    %1713 = vmatprep.subr.bf16.mxu0 0
    %1714 = vmatpush1.bf16.msra.mxu0 0
    %1715 = vmatprep.subr.bf16.mxu0 0
    %1716 = vmatpush1.bf16.msra.mxu0 0
    %1717 = vmatprep.subr.bf16.mxu0 0
    %1718 = vmatpush1.bf16.msra.mxu0 0
    %1719 = vmatprep.subr.bf16.mxu0 0
    %1720 = vmatpush1.bf16.msra.mxu0 0
    %1721 = vmatprep.subr.bf16.mxu0 0
    %1722 = vmatpush1.bf16.msra.mxu0 0
    %1723 = vmatprep.mubr.bf16.mxu0 0
    %1724 = vmatmul.mubr.bf16.gmra.mrb[0].mxu0 %v1449
    %v1725 = vpop.f32.mrb[0].mxu0
    %v1726 = vadd.f32 %v354, %v1725
    %v1727 = vpop.f32.mrb[0].mxu0
    %v1728 = vpop.f32.mrb[0].mxu0
    %v1729 = vpop.f32.mrb[0].mxu0
    %1730 = vdwg.mxu0
    %1731 = vmatprep.subr.bf16.mxu0 0
    %1732 = vmatpush1.bf16.msra.mxu0 %v527
    %1733 = vmatprep.subr.bf16.mxu0 0
    %1734 = vmatpush1.bf16.msra.mxu0 %v528
    %1735 = vmatprep.subr.bf16.mxu0 0
    %1736 = vmatpush1.bf16.msra.mxu0 0
    %1737 = vmatprep.subr.bf16.mxu0 0
    %1738 = vmatpush1.bf16.msra.mxu0 0
    %1739 = vmatprep.subr.bf16.mxu0 0
    %1740 = vmatpush1.bf16.msra.mxu0 0
    %1741 = vmatprep.subr.bf16.mxu0 0
    %1742 = vmatpush1.bf16.msra.mxu0 0
    %1743 = vmatprep.subr.bf16.mxu0 0
    %1744 = vmatpush1.bf16.msra.mxu0 0
    %1745 = vmatprep.subr.bf16.mxu0 0
    %1746 = vmatpush1.bf16.msra.mxu0 0
    %1747 = vmatprep.subr.bf16.mxu0 0
    %1748 = vmatpush1.bf16.msra.mxu0 0
    %1749 = vmatprep.subr.bf16.mxu0 0
    %1750 = vmatpush1.bf16.msra.mxu0 0
    %1751 = vmatprep.subr.bf16.mxu0 0
    %1752 = vmatpush1.bf16.msra.mxu0 0
    %1753 = vmatprep.subr.bf16.mxu0 0
    %1754 = vmatpush1.bf16.msra.mxu0 0
    %1755 = vmatprep.subr.bf16.mxu0 0
    %1756 = vmatpush1.bf16.msra.mxu0 0
    %1757 = vmatprep.subr.bf16.mxu0 0
    %1758 = vmatpush1.bf16.msra.mxu0 0
    %1759 = vmatprep.subr.bf16.mxu0 0
    %1760 = vmatpush1.bf16.msra.mxu0 0
    %1761 = vmatprep.subr.bf16.mxu0 0
    %1762 = vmatpush1.bf16.msra.mxu0 0
    %1763 = vmatprep.mubr.bf16.mxu0 0
    %1764 = vmatmul.mubr.bf16.gmra.mrb[0].mxu0 %v1449
    %v1765 = vpop.f32.mrb[0].mxu0
    %v1766 = vadd.f32 %v358, %v1765
    %v1767 = vpop.f32.mrb[0].mxu0
    %v1768 = vpop.f32.mrb[0].mxu0
    %v1769 = vpop.f32.mrb[0].mxu0
    %1770 = vdwg.mxu0
    %1771 = vmatprep.subr.bf16.mxu0 0
    %1772 = vmatpush1.bf16.msra.mxu0 %v603
    %1773 = vmatprep.subr.bf16.mxu0 0
    %1774 = vmatpush1.bf16.msra.mxu0 %v604
    %1775 = vmatprep.subr.bf16.mxu0 0
    %1776 = vmatpush1.bf16.msra.mxu0 0
    %1777 = vmatprep.subr.bf16.mxu0 0
    %1778 = vmatpush1.bf16.msra.mxu0 0
    %1779 = vmatprep.subr.bf16.mxu0 0
    %1780 = vmatpush1.bf16.msra.mxu0 0
    %1781 = vmatprep.subr.bf16.mxu0 0
    %1782 = vmatpush1.bf16.msra.mxu0 0
    %1783 = vmatprep.subr.bf16.mxu0 0
    %1784 = vmatpush1.bf16.msra.mxu0 0
    %1785 = vmatprep.subr.bf16.mxu0 0
    %1786 = vmatpush1.bf16.msra.mxu0 0
    %1787 = vmatprep.subr.bf16.mxu0 0
    %1788 = vmatpush1.bf16.msra.mxu0 0
    %1789 = vmatprep.subr.bf16.mxu0 0
    %1790 = vmatpush1.bf16.msra.mxu0 0
    %1791 = vmatprep.subr.bf16.mxu0 0
    %1792 = vmatpush1.bf16.msra.mxu0 0
    %1793 = vmatprep.subr.bf16.mxu0 0
    %1794 = vmatpush1.bf16.msra.mxu0 0
    %1795 = vmatprep.subr.bf16.mxu0 0
    %1796 = vmatpush1.bf16.msra.mxu0 0
    %1797 = vmatprep.subr.bf16.mxu0 0
    %1798 = vmatpush1.bf16.msra.mxu0 0
    %1799 = vmatprep.subr.bf16.mxu0 0
    %1800 = vmatpush1.bf16.msra.mxu0 0
    %1801 = vmatprep.subr.bf16.mxu0 0
    %1802 = vmatpush1.bf16.msra.mxu0 0
    %1803 = vmatprep.mubr.bf16.mxu0 0
    %1804 = vmatmul.mubr.bf16.gmra.mrb[0].mxu0 %v1449
    %v1805 = vpop.f32.mrb[0].mxu0
    %v1806 = vadd.f32 %v578, %v1805
    %v1807 = vpop.f32.mrb[0].mxu0
    %v1808 = vpop.f32.mrb[0].mxu0
    %v1809 = vpop.f32.mrb[0].mxu0
    %1810 = vdwg.mxu0
    %1811 = vmatprep.subr.bf16.mxu0 0
    %1812 = vmatpush1.bf16.msra.mxu0 %v655
    %1813 = vmatprep.subr.bf16.mxu0 0
    %1814 = vmatpush1.bf16.msra.mxu0 %v656
    %1815 = vmatprep.subr.bf16.mxu0 0
    %1816 = vmatpush1.bf16.msra.mxu0 0
    %1817 = vmatprep.subr.bf16.mxu0 0
    %1818 = vmatpush1.bf16.msra.mxu0 0
    %1819 = vmatprep.subr.bf16.mxu0 0
    %1820 = vmatpush1.bf16.msra.mxu0 0
    %1821 = vmatprep.subr.bf16.mxu0 0
    %1822 = vmatpush1.bf16.msra.mxu0 0
    %1823 = vmatprep.subr.bf16.mxu0 0
    %1824 = vmatpush1.bf16.msra.mxu0 0
    %1825 = vmatprep.subr.bf16.mxu0 0
    %1826 = vmatpush1.bf16.msra.mxu0 0
    %1827 = vmatprep.subr.bf16.mxu0 0
    %1828 = vmatpush1.bf16.msra.mxu0 0
    %1829 = vmatprep.subr.bf16.mxu0 0
    %1830 = vmatpush1.bf16.msra.mxu0 0
    %1831 = vmatprep.subr.bf16.mxu0 0
    %1832 = vmatpush1.bf16.msra.mxu0 0
    %1833 = vmatprep.subr.bf16.mxu0 0
    %1834 = vmatpush1.bf16.msra.mxu0 0
    %1835 = vmatprep.subr.bf16.mxu0 0
    %1836 = vmatpush1.bf16.msra.mxu0 0
    %1837 = vmatprep.subr.bf16.mxu0 0
    %1838 = vmatpush1.bf16.msra.mxu0 0
    %1839 = vmatprep.subr.bf16.mxu0 0
    %1840 = vmatpush1.bf16.msra.mxu0 0
    %1841 = vmatprep.subr.bf16.mxu0 0
    %1842 = vmatpush1.bf16.msra.mxu0 0
    %1843 = vmatprep.mubr.bf16.mxu0 0
    %1844 = vmatmul.mubr.bf16.gmra.mrb[0].mxu0 %v1449
    %v1845 = vpop.f32.mrb[0].mxu0
    %v1846 = vadd.f32 %v582, %v1845
    %v1847 = vpop.f32.mrb[0].mxu0
    %v1848 = vpop.f32.mrb[0].mxu0
    %v1849 = vpop.f32.mrb[0].mxu0
    %1850 = vdwg.mxu0
    %1851 = vmatprep.subr.bf16.mxu0 0
    %1852 = vmatpush1.bf16.msra.mxu0 %v707
    %1853 = vmatprep.subr.bf16.mxu0 0
    %1854 = vmatpush1.bf16.msra.mxu0 %v708
    %1855 = vmatprep.subr.bf16.mxu0 0
    %1856 = vmatpush1.bf16.msra.mxu0 0
    %1857 = vmatprep.subr.bf16.mxu0 0
    %1858 = vmatpush1.bf16.msra.mxu0 0
    %1859 = vmatprep.subr.bf16.mxu0 0
    %1860 = vmatpush1.bf16.msra.mxu0 0
    %1861 = vmatprep.subr.bf16.mxu0 0
    %1862 = vmatpush1.bf16.msra.mxu0 0
    %1863 = vmatprep.subr.bf16.mxu0 0
    %1864 = vmatpush1.bf16.msra.mxu0 0
    %1865 = vmatprep.subr.bf16.mxu0 0
    %1866 = vmatpush1.bf16.msra.mxu0 0
    %1867 = vmatprep.subr.bf16.mxu0 0
    %1868 = vmatpush1.bf16.msra.mxu0 0
    %1869 = vmatprep.subr.bf16.mxu0 0
    %1870 = vmatpush1.bf16.msra.mxu0 0
    %1871 = vmatprep.subr.bf16.mxu0 0
    %1872 = vmatpush1.bf16.msra.mxu0 0
    %1873 = vmatprep.subr.bf16.mxu0 0
    %1874 = vmatpush1.bf16.msra.mxu0 0
    %1875 = vmatprep.subr.bf16.mxu0 0
    %1876 = vmatpush1.bf16.msra.mxu0 0
    %1877 = vmatprep.subr.bf16.mxu0 0
    %1878 = vmatpush1.bf16.msra.mxu0 0
    %1879 = vmatprep.subr.bf16.mxu0 0
    %1880 = vmatpush1.bf16.msra.mxu0 0
    %1881 = vmatprep.subr.bf16.mxu0 0
    %1882 = vmatpush1.bf16.msra.mxu0 0
    %1883 = vmatprep.mubr.bf16.mxu0 0
    %1884 = vmatmul.mubr.bf16.gmra.mrb[0].mxu0 %v1449
    %v1885 = vpop.f32.mrb[0].mxu0
    %v1886 = vadd.f32 %v586, %v1885
    %v1887 = vpop.f32.mrb[0].mxu0
    %v1888 = vpop.f32.mrb[0].mxu0
    %v1889 = vpop.f32.mrb[0].mxu0
    %1890 = vdwg.mxu0
    %1891 = vmatprep.subr.bf16.mxu0 0
    %1892 = vmatpush1.bf16.msra.mxu0 %v759
    %1893 = vmatprep.subr.bf16.mxu0 0
    %1894 = vmatpush1.bf16.msra.mxu0 %v760
    %1895 = vmatprep.subr.bf16.mxu0 0
    %1896 = vmatpush1.bf16.msra.mxu0 0
    %1897 = vmatprep.subr.bf16.mxu0 0
    %1898 = vmatpush1.bf16.msra.mxu0 0
    %1899 = vmatprep.subr.bf16.mxu0 0
    %1900 = vmatpush1.bf16.msra.mxu0 0
    %1901 = vmatprep.subr.bf16.mxu0 0
    %1902 = vmatpush1.bf16.msra.mxu0 0
    %1903 = vmatprep.subr.bf16.mxu0 0
    %1904 = vmatpush1.bf16.msra.mxu0 0
    %1905 = vmatprep.subr.bf16.mxu0 0
    %1906 = vmatpush1.bf16.msra.mxu0 0
    %1907 = vmatprep.subr.bf16.mxu0 0
    %1908 = vmatpush1.bf16.msra.mxu0 0
    %1909 = vmatprep.subr.bf16.mxu0 0
    %1910 = vmatpush1.bf16.msra.mxu0 0
    %1911 = vmatprep.subr.bf16.mxu0 0
    %1912 = vmatpush1.bf16.msra.mxu0 0
    %1913 = vmatprep.subr.bf16.mxu0 0
    %1914 = vmatpush1.bf16.msra.mxu0 0
    %1915 = vmatprep.subr.bf16.mxu0 0
    %1916 = vmatpush1.bf16.msra.mxu0 0
    %1917 = vmatprep.subr.bf16.mxu0 0
    %1918 = vmatpush1.bf16.msra.mxu0 0
    %1919 = vmatprep.subr.bf16.mxu0 0
    %1920 = vmatpush1.bf16.msra.mxu0 0
    %1921 = vmatprep.subr.bf16.mxu0 0
    %1922 = vmatpush1.bf16.msra.mxu0 0
    %1923 = vmatprep.mubr.bf16.mxu0 0
    %1924 = vmatmul.mubr.bf16.gmra.mrb[0].mxu0 %v1449
    %v1925 = vpop.f32.mrb[0].mxu0
    %v1926 = vadd.f32 %v590, %v1925
    %v1927 = vpop.f32.mrb[0].mxu0
    %v1928 = vpop.f32.mrb[0].mxu0
    %v1929 = vpop.f32.mrb[0].mxu0
    %1930 = vdwg.mxu0
    %v1931 = vpack.c.bf16 %v1486, %v1486
    %v1932 = vpack.c.bf16 %v1526, %v1526
    %v1933 = vpack.c.bf16 %v1566, %v1566
    %v1934 = vpack.c.bf16 %v1606, %v1606
    %v1935 = vpack.c.bf16 %v1646, %v1646
    %v1936 = vpack.c.bf16 %v1686, %v1686
    %v1937 = vpack.c.bf16 %v1726, %v1726
    %v1938 = vpack.c.bf16 %v1766, %v1766
    %v1940 = vsel %vm811, %v1931, 0
    %v1943 = vsel %vm811, %v1935, 0
    %1945 = vmatprep.subr.bf16.mxu0 0
    %1946 = vmatpush1.bf16.xpose.msra.mxu0 %v1943
    %1947 = vmatprep.subr.bf16.mxu0 0
    %1948 = vmatpush1.bf16.xpose.msra.mxu0 0
    %1949 = vmatprep.subr.bf16.mxu0 0
    %1950 = vmatpush1.bf16.xpose.msra.mxu0 0
    %1951 = vmatprep.subr.bf16.mxu0 0
    %1952 = vmatpush1.bf16.xpose.msra.mxu0 0
    %1953 = vmatprep.subr.bf16.mxu0 0
    %1954 = vmatpush1.bf16.xpose.msra.mxu0 0
    %1955 = vmatprep.subr.bf16.mxu0 0
    %1956 = vmatpush1.bf16.xpose.msra.mxu0 0
    %1957 = vmatprep.subr.bf16.mxu0 0
    %1958 = vmatpush1.bf16.xpose.msra.mxu0 0
    %1959 = vmatprep.subr.bf16.mxu0 0
    %1960 = vmatpush1.bf16.xpose.msra.mxu0 0
    %1961 = vmatprep.subr.bf16.mxu0 0
    %1962 = vmatpush1.bf16.xpose.msra.mxu0 0
    %1963 = vmatprep.subr.bf16.mxu0 0
    %1964 = vmatpush1.bf16.xpose.msra.mxu0 0
    %1965 = vmatprep.subr.bf16.mxu0 0
    %1966 = vmatpush1.bf16.xpose.msra.mxu0 0
    %1967 = vmatprep.subr.bf16.mxu0 0
    %1968 = vmatpush1.bf16.xpose.msra.mxu0 0
    %1969 = vmatprep.subr.bf16.mxu0 0
    %1970 = vmatpush1.bf16.xpose.msra.mxu0 0
    %1971 = vmatprep.subr.bf16.mxu0 0
    %1972 = vmatpush1.bf16.xpose.msra.mxu0 0
    %1973 = vmatprep.subr.bf16.mxu0 0
    %1974 = vmatpush1.bf16.xpose.msra.mxu0 0
    %1975 = vmatprep.subr.bf16.mxu0 0
    %1976 = vmatpush1.bf16.xpose.msra.mxu0 0
    %1977 = vmatprep.mubr.bf16.mxu0 0
    %1978 = vmatmul.mubr.bf16.gmra.mrb[0].mxu0 %v1940
    %v1979 = vpop.f32.mrb[0].mxu0
    %v1980 = vadd.f32 0.0, %v1979
    %v1981 = vpop.f32.mrb[0].mxu0
    %v1982 = vpop.f32.mrb[0].mxu0
    %v1983 = vpop.f32.mrb[0].mxu0
    %1984 = vdwg.mxu0
    %v1986 = vsel %vm811, %v1932, 0
    %v1989 = vsel %vm811, %v1936, 0
    %1991 = vmatprep.subr.bf16.mxu0 0
    %1992 = vmatpush1.bf16.xpose.msra.mxu0 %v1989
    %1993 = vmatprep.subr.bf16.mxu0 0
    %1994 = vmatpush1.bf16.xpose.msra.mxu0 0
    %1995 = vmatprep.subr.bf16.mxu0 0
    %1996 = vmatpush1.bf16.xpose.msra.mxu0 0
    %1997 = vmatprep.subr.bf16.mxu0 0
    %1998 = vmatpush1.bf16.xpose.msra.mxu0 0
    %1999 = vmatprep.subr.bf16.mxu0 0
    %2000 = vmatpush1.bf16.xpose.msra.mxu0 0
    %2001 = vmatprep.subr.bf16.mxu0 0
    %2002 = vmatpush1.bf16.xpose.msra.mxu0 0
    %2003 = vmatprep.subr.bf16.mxu0 0
    %2004 = vmatpush1.bf16.xpose.msra.mxu0 0
    %2005 = vmatprep.subr.bf16.mxu0 0
    %2006 = vmatpush1.bf16.xpose.msra.mxu0 0
    %2007 = vmatprep.subr.bf16.mxu0 0
    %2008 = vmatpush1.bf16.xpose.msra.mxu0 0
    %2009 = vmatprep.subr.bf16.mxu0 0
    %2010 = vmatpush1.bf16.xpose.msra.mxu0 0
    %2011 = vmatprep.subr.bf16.mxu0 0
    %2012 = vmatpush1.bf16.xpose.msra.mxu0 0
    %2013 = vmatprep.subr.bf16.mxu0 0
    %2014 = vmatpush1.bf16.xpose.msra.mxu0 0
    %2015 = vmatprep.subr.bf16.mxu0 0
    %2016 = vmatpush1.bf16.xpose.msra.mxu0 0
    %2017 = vmatprep.subr.bf16.mxu0 0
    %2018 = vmatpush1.bf16.xpose.msra.mxu0 0
    %2019 = vmatprep.subr.bf16.mxu0 0
    %2020 = vmatpush1.bf16.xpose.msra.mxu0 0
    %2021 = vmatprep.subr.bf16.mxu0 0
    %2022 = vmatpush1.bf16.xpose.msra.mxu0 0
    %2023 = vmatprep.mubr.bf16.mxu0 0
    %2024 = vmatmul.mubr.bf16.gmra.mrb[0].mxu0 %v1986
    %v2025 = vpop.f32.mrb[0].mxu0
    %v2026 = vadd.f32 0.0, %v2025
    %v2027 = vpop.f32.mrb[0].mxu0
    %v2028 = vpop.f32.mrb[0].mxu0
    %v2029 = vpop.f32.mrb[0].mxu0
    %2030 = vdwg.mxu0
    %v2032 = vsel %vm811, %v1933, 0
    %v2035 = vsel %vm811, %v1937, 0
    %2037 = vmatprep.subr.bf16.mxu0 0
    %2038 = vmatpush1.bf16.xpose.msra.mxu0 %v2035
    %2039 = vmatprep.subr.bf16.mxu0 0
    %2040 = vmatpush1.bf16.xpose.msra.mxu0 0
    %2041 = vmatprep.subr.bf16.mxu0 0
    %2042 = vmatpush1.bf16.xpose.msra.mxu0 0
    %2043 = vmatprep.subr.bf16.mxu0 0
    %2044 = vmatpush1.bf16.xpose.msra.mxu0 0
    %2045 = vmatprep.subr.bf16.mxu0 0
    %2046 = vmatpush1.bf16.xpose.msra.mxu0 0
    %2047 = vmatprep.subr.bf16.mxu0 0
    %2048 = vmatpush1.bf16.xpose.msra.mxu0 0
    %2049 = vmatprep.subr.bf16.mxu0 0
    %2050 = vmatpush1.bf16.xpose.msra.mxu0 0
    %2051 = vmatprep.subr.bf16.mxu0 0
    %2052 = vmatpush1.bf16.xpose.msra.mxu0 0
    %2053 = vmatprep.subr.bf16.mxu0 0
    %2054 = vmatpush1.bf16.xpose.msra.mxu0 0
    %2055 = vmatprep.subr.bf16.mxu0 0
    %2056 = vmatpush1.bf16.xpose.msra.mxu0 0
    %2057 = vmatprep.subr.bf16.mxu0 0
    %2058 = vmatpush1.bf16.xpose.msra.mxu0 0
    %2059 = vmatprep.subr.bf16.mxu0 0
    %2060 = vmatpush1.bf16.xpose.msra.mxu0 0
    %2061 = vmatprep.subr.bf16.mxu0 0
    %2062 = vmatpush1.bf16.xpose.msra.mxu0 0
    %2063 = vmatprep.subr.bf16.mxu0 0
    %2064 = vmatpush1.bf16.xpose.msra.mxu0 0
    %2065 = vmatprep.subr.bf16.mxu0 0
    %2066 = vmatpush1.bf16.xpose.msra.mxu0 0
    %2067 = vmatprep.subr.bf16.mxu0 0
    %2068 = vmatpush1.bf16.xpose.msra.mxu0 0
    %2069 = vmatprep.mubr.bf16.mxu0 0
    %2070 = vmatmul.mubr.bf16.gmra.mrb[0].mxu0 %v2032
    %v2071 = vpop.f32.mrb[0].mxu0
    %v2072 = vadd.f32 0.0, %v2071
    %v2073 = vpop.f32.mrb[0].mxu0
    %v2074 = vpop.f32.mrb[0].mxu0
    %v2075 = vpop.f32.mrb[0].mxu0
    %2076 = vdwg.mxu0
    %v2078 = vsel %vm811, %v1934, 0
    %v2081 = vsel %vm811, %v1938, 0
    %2083 = vmatprep.subr.bf16.mxu0 0
    %2084 = vmatpush1.bf16.xpose.msra.mxu0 %v2081
    %2085 = vmatprep.subr.bf16.mxu0 0
    %2086 = vmatpush1.bf16.xpose.msra.mxu0 0
    %2087 = vmatprep.subr.bf16.mxu0 0
    %2088 = vmatpush1.bf16.xpose.msra.mxu0 0
    %2089 = vmatprep.subr.bf16.mxu0 0
    %2090 = vmatpush1.bf16.xpose.msra.mxu0 0
    %2091 = vmatprep.subr.bf16.mxu0 0
    %2092 = vmatpush1.bf16.xpose.msra.mxu0 0
    %2093 = vmatprep.subr.bf16.mxu0 0
    %2094 = vmatpush1.bf16.xpose.msra.mxu0 0
    %2095 = vmatprep.subr.bf16.mxu0 0
    %2096 = vmatpush1.bf16.xpose.msra.mxu0 0
    %2097 = vmatprep.subr.bf16.mxu0 0
    %2098 = vmatpush1.bf16.xpose.msra.mxu0 0
    %2099 = vmatprep.subr.bf16.mxu0 0
    %2100 = vmatpush1.bf16.xpose.msra.mxu0 0
    %2101 = vmatprep.subr.bf16.mxu0 0
    %2102 = vmatpush1.bf16.xpose.msra.mxu0 0
    %2103 = vmatprep.subr.bf16.mxu0 0
    %2104 = vmatpush1.bf16.xpose.msra.mxu0 0
    %2105 = vmatprep.subr.bf16.mxu0 0
    %2106 = vmatpush1.bf16.xpose.msra.mxu0 0
    %2107 = vmatprep.subr.bf16.mxu0 0
    %2108 = vmatpush1.bf16.xpose.msra.mxu0 0
    %2109 = vmatprep.subr.bf16.mxu0 0
    %2110 = vmatpush1.bf16.xpose.msra.mxu0 0
    %2111 = vmatprep.subr.bf16.mxu0 0
    %2112 = vmatpush1.bf16.xpose.msra.mxu0 0
    %2113 = vmatprep.subr.bf16.mxu0 0
    %2114 = vmatpush1.bf16.xpose.msra.mxu0 0
    %2115 = vmatprep.mubr.bf16.mxu0 0
    %2116 = vmatmul.mubr.bf16.gmra.mrb[0].mxu0 %v2078
    %v2117 = vpop.f32.mrb[0].mxu0
    %v2118 = vadd.f32 0.0, %v2117
    %v2119 = vpop.f32.mrb[0].mxu0
    %v2120 = vpop.f32.mrb[0].mxu0
    %v2121 = vpop.f32.mrb[0].mxu0
    %2122 = vdwg.mxu0
    %v2123 = vsel %vm811, %v1980, -inf
    %2124 = vmax.xlane.f32.xlu0 %v2123
    %v2125 = vpop.xlane.xlu0 %2124
    %v2126 = vsel %vm811, %v2026, -inf
    %2127 = vmax.xlane.f32.xlu0 %v2126
    %v2128 = vpop.xlane.xlu0 %2127
    %v2129 = vsel %vm811, %v2072, -inf
    %2130 = vmax.xlane.f32.xlu0 %v2129
    %v2131 = vpop.xlane.xlu0 %2130
    %v2132 = vsel %vm811, %v2118, -inf
    %2133 = vmax.xlane.f32.xlu0 %v2132
    %v2134 = vpop.xlane.xlu0 %2133
    %v2135 = vsub.f32 %v1980, %v2125
    %v2136 = vsub.f32 %v2026, %v2128
    %v2137 = vsub.f32 %v2072, %v2131
    %v2138 = vsub.f32 %v2118, %v2134
    %v2139 = vmul.f32 %v2135, 1.442695
    %v2140 = vpow.pop %v2139
    %v2141 = vmul.f32 %v2136, 1.442695
    %v2142 = vpow.pop %v2141
    %v2143 = vmul.f32 %v2137, 1.442695
    %v2144 = vpow.pop %v2143
    %v2145 = vmul.f32 %v2138, 1.442695
    %v2146 = vpow.pop %v2145
    %v2147 = vsel %vm811, %v2140, 0.0
    %2148 = vadd.xlane.f32.xlu0 %v2147
    %v2149 = vpop.xlane.xlu0 %2148
    %v2150 = vsel %vm811, %v2142, 0.0
    %2151 = vadd.xlane.f32.xlu0 %v2150
    %v2152 = vpop.xlane.xlu0 %2151
    %v2153 = vsel %vm811, %v2144, 0.0
    %2154 = vadd.xlane.f32.xlu0 %v2153
    %v2155 = vpop.xlane.xlu0 %2154
    %v2156 = vsel %vm811, %v2146, 0.0
    %2157 = vadd.xlane.f32.xlu0 %v2156
    %v2158 = vpop.xlane.xlu0 %2157
    %v2159 = vrcp.pop %v2149
    %v2160 = vrcp.pop %v2152
    %v2161 = vrcp.pop %v2155
    %v2162 = vrcp.pop %v2158
    %v2163 = vmul.f32 %v2140, %v2159
    %v2164 = vmul.f32 %v2142, %v2160
    %v2165 = vmul.f32 %v2144, %v2161
    %v2166 = vmul.f32 %v2146, %v2162
    %v2167 = vpack.c.bf16 %v2163, %v2163
    %v2168 = vpack.c.bf16 %v2164, %v2164
    %v2169 = vpack.c.bf16 %v2165, %v2165
    %v2170 = vpack.c.bf16 %v2166, %v2166
    %v2171 = vpack.c.bf16 %v1806, %v1806
    %v2172 = vpack.c.bf16 %v1846, %v1846
    %v2173 = vpack.c.bf16 %v1886, %v1886
    %v2174 = vpack.c.bf16 %v1926, %v1926
    %v2176 = vsel %vm811, %v2167, 0
    %v2179 = vsel %vm1051, %v2171, 0
    %2181 = vmatprep.subr.bf16.mxu0 0
    %2182 = vmatpush1.bf16.msra.mxu0 %v2179
    %2183 = vmatprep.subr.bf16.mxu0 0
    %2184 = vmatpush1.bf16.msra.mxu0 0
    %2185 = vmatprep.subr.bf16.mxu0 0
    %2186 = vmatpush1.bf16.msra.mxu0 0
    %2187 = vmatprep.subr.bf16.mxu0 0
    %2188 = vmatpush1.bf16.msra.mxu0 0
    %2189 = vmatprep.subr.bf16.mxu0 0
    %2190 = vmatpush1.bf16.msra.mxu0 0
    %2191 = vmatprep.subr.bf16.mxu0 0
    %2192 = vmatpush1.bf16.msra.mxu0 0
    %2193 = vmatprep.subr.bf16.mxu0 0
    %2194 = vmatpush1.bf16.msra.mxu0 0
    %2195 = vmatprep.subr.bf16.mxu0 0
    %2196 = vmatpush1.bf16.msra.mxu0 0
    %2197 = vmatprep.subr.bf16.mxu0 0
    %2198 = vmatpush1.bf16.msra.mxu0 0
    %2199 = vmatprep.subr.bf16.mxu0 0
    %2200 = vmatpush1.bf16.msra.mxu0 0
    %2201 = vmatprep.subr.bf16.mxu0 0
    %2202 = vmatpush1.bf16.msra.mxu0 0
    %2203 = vmatprep.subr.bf16.mxu0 0
    %2204 = vmatpush1.bf16.msra.mxu0 0
    %2205 = vmatprep.subr.bf16.mxu0 0
    %2206 = vmatpush1.bf16.msra.mxu0 0
    %2207 = vmatprep.subr.bf16.mxu0 0
    %2208 = vmatpush1.bf16.msra.mxu0 0
    %2209 = vmatprep.subr.bf16.mxu0 0
    %2210 = vmatpush1.bf16.msra.mxu0 0
    %2211 = vmatprep.subr.bf16.mxu0 0
    %2212 = vmatpush1.bf16.msra.mxu0 0
    %2213 = vmatprep.mubr.bf16.mxu0 0
    %2214 = vmatmul.mubr.bf16.gmra.mrb[0].mxu0 %v2176
    %v2215 = vpop.f32.mrb[0].mxu0
    %v2216 = vadd.f32 0.0, %v2215
    %v2217 = vpop.f32.mrb[0].mxu0
    %v2218 = vpop.f32.mrb[0].mxu0
    %v2219 = vpop.f32.mrb[0].mxu0
    %2220 = vdwg.mxu0
    %v2222 = vsel %vm811, %v2168, 0
    %v2225 = vsel %vm1051, %v2172, 0
    %2227 = vmatprep.subr.bf16.mxu0 0
    %2228 = vmatpush1.bf16.msra.mxu0 %v2225
    %2229 = vmatprep.subr.bf16.mxu0 0
    %2230 = vmatpush1.bf16.msra.mxu0 0
    %2231 = vmatprep.subr.bf16.mxu0 0
    %2232 = vmatpush1.bf16.msra.mxu0 0
    %2233 = vmatprep.subr.bf16.mxu0 0
    %2234 = vmatpush1.bf16.msra.mxu0 0
    %2235 = vmatprep.subr.bf16.mxu0 0
    %2236 = vmatpush1.bf16.msra.mxu0 0
    %2237 = vmatprep.subr.bf16.mxu0 0
    %2238 = vmatpush1.bf16.msra.mxu0 0
    %2239 = vmatprep.subr.bf16.mxu0 0
    %2240 = vmatpush1.bf16.msra.mxu0 0
    %2241 = vmatprep.subr.bf16.mxu0 0
    %2242 = vmatpush1.bf16.msra.mxu0 0
    %2243 = vmatprep.subr.bf16.mxu0 0
    %2244 = vmatpush1.bf16.msra.mxu0 0
    %2245 = vmatprep.subr.bf16.mxu0 0
    %2246 = vmatpush1.bf16.msra.mxu0 0
    %2247 = vmatprep.subr.bf16.mxu0 0
    %2248 = vmatpush1.bf16.msra.mxu0 0
    %2249 = vmatprep.subr.bf16.mxu0 0
    %2250 = vmatpush1.bf16.msra.mxu0 0
    %2251 = vmatprep.subr.bf16.mxu0 0
    %2252 = vmatpush1.bf16.msra.mxu0 0
    %2253 = vmatprep.subr.bf16.mxu0 0
    %2254 = vmatpush1.bf16.msra.mxu0 0
    %2255 = vmatprep.subr.bf16.mxu0 0
    %2256 = vmatpush1.bf16.msra.mxu0 0
    %2257 = vmatprep.subr.bf16.mxu0 0
    %2258 = vmatpush1.bf16.msra.mxu0 0
    %2259 = vmatprep.mubr.bf16.mxu0 0
    %2260 = vmatmul.mubr.bf16.gmra.mrb[0].mxu0 %v2222
    %v2261 = vpop.f32.mrb[0].mxu0
    %v2262 = vadd.f32 0.0, %v2261
    %v2263 = vpop.f32.mrb[0].mxu0
    %v2264 = vpop.f32.mrb[0].mxu0
    %v2265 = vpop.f32.mrb[0].mxu0
    %2266 = vdwg.mxu0
    %v2268 = vsel %vm811, %v2169, 0
    %v2271 = vsel %vm1051, %v2173, 0
    %2273 = vmatprep.subr.bf16.mxu0 0
    %2274 = vmatpush1.bf16.msra.mxu0 %v2271
    %2275 = vmatprep.subr.bf16.mxu0 0
    %2276 = vmatpush1.bf16.msra.mxu0 0
    %2277 = vmatprep.subr.bf16.mxu0 0
    %2278 = vmatpush1.bf16.msra.mxu0 0
    %2279 = vmatprep.subr.bf16.mxu0 0
    %2280 = vmatpush1.bf16.msra.mxu0 0
    %2281 = vmatprep.subr.bf16.mxu0 0
    %2282 = vmatpush1.bf16.msra.mxu0 0
    %2283 = vmatprep.subr.bf16.mxu0 0
    %2284 = vmatpush1.bf16.msra.mxu0 0
    %2285 = vmatprep.subr.bf16.mxu0 0
    %2286 = vmatpush1.bf16.msra.mxu0 0
    %2287 = vmatprep.subr.bf16.mxu0 0
    %2288 = vmatpush1.bf16.msra.mxu0 0
    %2289 = vmatprep.subr.bf16.mxu0 0
    %2290 = vmatpush1.bf16.msra.mxu0 0
    %2291 = vmatprep.subr.bf16.mxu0 0
    %2292 = vmatpush1.bf16.msra.mxu0 0
    %2293 = vmatprep.subr.bf16.mxu0 0
    %2294 = vmatpush1.bf16.msra.mxu0 0
    %2295 = vmatprep.subr.bf16.mxu0 0
    %2296 = vmatpush1.bf16.msra.mxu0 0
    %2297 = vmatprep.subr.bf16.mxu0 0
    %2298 = vmatpush1.bf16.msra.mxu0 0
    %2299 = vmatprep.subr.bf16.mxu0 0
    %2300 = vmatpush1.bf16.msra.mxu0 0
    %2301 = vmatprep.subr.bf16.mxu0 0
    %2302 = vmatpush1.bf16.msra.mxu0 0
    %2303 = vmatprep.subr.bf16.mxu0 0
    %2304 = vmatpush1.bf16.msra.mxu0 0
    %2305 = vmatprep.mubr.bf16.mxu0 0
    %2306 = vmatmul.mubr.bf16.gmra.mrb[0].mxu0 %v2268
    %v2307 = vpop.f32.mrb[0].mxu0
    %v2308 = vadd.f32 0.0, %v2307
    %v2309 = vpop.f32.mrb[0].mxu0
    %v2310 = vpop.f32.mrb[0].mxu0
    %v2311 = vpop.f32.mrb[0].mxu0
    %2312 = vdwg.mxu0
    %v2314 = vsel %vm811, %v2170, 0
    %v2317 = vsel %vm1051, %v2174, 0
    %2319 = vmatprep.subr.bf16.mxu0 0
    %2320 = vmatpush1.bf16.msra.mxu0 %v2317
    %2321 = vmatprep.subr.bf16.mxu0 0
    %2322 = vmatpush1.bf16.msra.mxu0 0
    %2323 = vmatprep.subr.bf16.mxu0 0
    %2324 = vmatpush1.bf16.msra.mxu0 0
    %2325 = vmatprep.subr.bf16.mxu0 0
    %2326 = vmatpush1.bf16.msra.mxu0 0
    %2327 = vmatprep.subr.bf16.mxu0 0
    %2328 = vmatpush1.bf16.msra.mxu0 0
    %2329 = vmatprep.subr.bf16.mxu0 0
    %2330 = vmatpush1.bf16.msra.mxu0 0
    %2331 = vmatprep.subr.bf16.mxu0 0
    %2332 = vmatpush1.bf16.msra.mxu0 0
    %2333 = vmatprep.subr.bf16.mxu0 0
    %2334 = vmatpush1.bf16.msra.mxu0 0
    %2335 = vmatprep.subr.bf16.mxu0 0
    %2336 = vmatpush1.bf16.msra.mxu0 0
    %2337 = vmatprep.subr.bf16.mxu0 0
    %2338 = vmatpush1.bf16.msra.mxu0 0
    %2339 = vmatprep.subr.bf16.mxu0 0
    %2340 = vmatpush1.bf16.msra.mxu0 0
    %2341 = vmatprep.subr.bf16.mxu0 0
    %2342 = vmatpush1.bf16.msra.mxu0 0
    %2343 = vmatprep.subr.bf16.mxu0 0
    %2344 = vmatpush1.bf16.msra.mxu0 0
    %2345 = vmatprep.subr.bf16.mxu0 0
    %2346 = vmatpush1.bf16.msra.mxu0 0
    %2347 = vmatprep.subr.bf16.mxu0 0
    %2348 = vmatpush1.bf16.msra.mxu0 0
    %2349 = vmatprep.subr.bf16.mxu0 0
    %2350 = vmatpush1.bf16.msra.mxu0 0
    %2351 = vmatprep.mubr.bf16.mxu0 0
    %2352 = vmatmul.mubr.bf16.gmra.mrb[0].mxu0 %v2314
    %v2353 = vpop.f32.mrb[0].mxu0
    %v2354 = vadd.f32 0.0, %v2353
    %v2355 = vpop.f32.mrb[0].mxu0
    %v2356 = vpop.f32.mrb[0].mxu0
    %v2357 = vpop.f32.mrb[0].mxu0
    %2358 = vdwg.mxu0
    %v2359 = vpack.c.bf16 %v2216, %v2216
    %v2360 = vpack.c.bf16 %v2262, %v2262
    %v2361 = vpack.c.bf16 %v2308, %v2308
    %v2362 = vpack.c.bf16 %v2354, %v2354
    %v2364 = vsel %vm811, %v2359, 0
    %2366 = vmatprep.subr.bf16.mxu0 0
    %2367 = vmatpush1.bf16.msra.mxu0 %v1241
    %2368 = vmatprep.subr.bf16.mxu0 0
    %2369 = vmatpush1.bf16.msra.mxu0 0
    %2370 = vmatprep.subr.bf16.mxu0 0
    %2371 = vmatpush1.bf16.msra.mxu0 0
    %2372 = vmatprep.subr.bf16.mxu0 0
    %2373 = vmatpush1.bf16.msra.mxu0 0
    %2374 = vmatprep.subr.bf16.mxu0 0
    %2375 = vmatpush1.bf16.msra.mxu0 0
    %2376 = vmatprep.subr.bf16.mxu0 0
    %2377 = vmatpush1.bf16.msra.mxu0 0
    %2378 = vmatprep.subr.bf16.mxu0 0
    %2379 = vmatpush1.bf16.msra.mxu0 0
    %2380 = vmatprep.subr.bf16.mxu0 0
    %2381 = vmatpush1.bf16.msra.mxu0 0
    %2382 = vmatprep.subr.bf16.mxu0 0
    %2383 = vmatpush1.bf16.msra.mxu0 0
    %2384 = vmatprep.subr.bf16.mxu0 0
    %2385 = vmatpush1.bf16.msra.mxu0 0
    %2386 = vmatprep.subr.bf16.mxu0 0
    %2387 = vmatpush1.bf16.msra.mxu0 0
    %2388 = vmatprep.subr.bf16.mxu0 0
    %2389 = vmatpush1.bf16.msra.mxu0 0
    %2390 = vmatprep.subr.bf16.mxu0 0
    %2391 = vmatpush1.bf16.msra.mxu0 0
    %2392 = vmatprep.subr.bf16.mxu0 0
    %2393 = vmatpush1.bf16.msra.mxu0 0
    %2394 = vmatprep.subr.bf16.mxu0 0
    %2395 = vmatpush1.bf16.msra.mxu0 0
    %2396 = vmatprep.subr.bf16.mxu0 0
    %2397 = vmatpush1.bf16.msra.mxu0 0
    %2398 = vmatprep.mubr.bf16.mxu0 0
    %2399 = vmatmul.mubr.bf16.gmra.mrb[0].mxu0 %v2364
    %v2400 = vpop.f32.mrb[0].mxu0
    %v2401 = vadd.f32 0.0, %v2400
    %v2402 = vpop.f32.mrb[0].mxu0
    %v2403 = vpop.f32.mrb[0].mxu0
    %v2404 = vpop.f32.mrb[0].mxu0
    %2405 = vdwg.mxu0
    %v2407 = vsel %vm811, %v2360, 0
    %2409 = vmatprep.subr.bf16.mxu0 0
    %2410 = vmatpush1.bf16.msra.mxu0 %v1287
    %2411 = vmatprep.subr.bf16.mxu0 0
    %2412 = vmatpush1.bf16.msra.mxu0 0
    %2413 = vmatprep.subr.bf16.mxu0 0
    %2414 = vmatpush1.bf16.msra.mxu0 0
    %2415 = vmatprep.subr.bf16.mxu0 0
    %2416 = vmatpush1.bf16.msra.mxu0 0
    %2417 = vmatprep.subr.bf16.mxu0 0
    %2418 = vmatpush1.bf16.msra.mxu0 0
    %2419 = vmatprep.subr.bf16.mxu0 0
    %2420 = vmatpush1.bf16.msra.mxu0 0
    %2421 = vmatprep.subr.bf16.mxu0 0
    %2422 = vmatpush1.bf16.msra.mxu0 0
    %2423 = vmatprep.subr.bf16.mxu0 0
    %2424 = vmatpush1.bf16.msra.mxu0 0
    %2425 = vmatprep.subr.bf16.mxu0 0
    %2426 = vmatpush1.bf16.msra.mxu0 0
    %2427 = vmatprep.subr.bf16.mxu0 0
    %2428 = vmatpush1.bf16.msra.mxu0 0
    %2429 = vmatprep.subr.bf16.mxu0 0
    %2430 = vmatpush1.bf16.msra.mxu0 0
    %2431 = vmatprep.subr.bf16.mxu0 0
    %2432 = vmatpush1.bf16.msra.mxu0 0
    %2433 = vmatprep.subr.bf16.mxu0 0
    %2434 = vmatpush1.bf16.msra.mxu0 0
    %2435 = vmatprep.subr.bf16.mxu0 0
    %2436 = vmatpush1.bf16.msra.mxu0 0
    %2437 = vmatprep.subr.bf16.mxu0 0
    %2438 = vmatpush1.bf16.msra.mxu0 0
    %2439 = vmatprep.subr.bf16.mxu0 0
    %2440 = vmatpush1.bf16.msra.mxu0 0
    %2441 = vmatprep.mubr.bf16.mxu0 0
    %2442 = vmatmul.mubr.bf16.gmra.mrb[0].mxu0 %v2407
    %v2443 = vpop.f32.mrb[0].mxu0
    %v2444 = vadd.f32 0.0, %v2443
    %v2445 = vpop.f32.mrb[0].mxu0
    %v2446 = vpop.f32.mrb[0].mxu0
    %v2447 = vpop.f32.mrb[0].mxu0
    %2448 = vdwg.mxu0
    %v2450 = vsel %vm811, %v2361, 0
    %2452 = vmatprep.subr.bf16.mxu0 0
    %2453 = vmatpush1.bf16.msra.mxu0 %v1333
    %2454 = vmatprep.subr.bf16.mxu0 0
    %2455 = vmatpush1.bf16.msra.mxu0 0
    %2456 = vmatprep.subr.bf16.mxu0 0
    %2457 = vmatpush1.bf16.msra.mxu0 0
    %2458 = vmatprep.subr.bf16.mxu0 0
    %2459 = vmatpush1.bf16.msra.mxu0 0
    %2460 = vmatprep.subr.bf16.mxu0 0
    %2461 = vmatpush1.bf16.msra.mxu0 0
    %2462 = vmatprep.subr.bf16.mxu0 0
    %2463 = vmatpush1.bf16.msra.mxu0 0
    %2464 = vmatprep.subr.bf16.mxu0 0
    %2465 = vmatpush1.bf16.msra.mxu0 0
    %2466 = vmatprep.subr.bf16.mxu0 0
    %2467 = vmatpush1.bf16.msra.mxu0 0
    %2468 = vmatprep.subr.bf16.mxu0 0
    %2469 = vmatpush1.bf16.msra.mxu0 0
    %2470 = vmatprep.subr.bf16.mxu0 0
    %2471 = vmatpush1.bf16.msra.mxu0 0
    %2472 = vmatprep.subr.bf16.mxu0 0
    %2473 = vmatpush1.bf16.msra.mxu0 0
    %2474 = vmatprep.subr.bf16.mxu0 0
    %2475 = vmatpush1.bf16.msra.mxu0 0
    %2476 = vmatprep.subr.bf16.mxu0 0
    %2477 = vmatpush1.bf16.msra.mxu0 0
    %2478 = vmatprep.subr.bf16.mxu0 0
    %2479 = vmatpush1.bf16.msra.mxu0 0
    %2480 = vmatprep.subr.bf16.mxu0 0
    %2481 = vmatpush1.bf16.msra.mxu0 0
    %2482 = vmatprep.subr.bf16.mxu0 0
    %2483 = vmatpush1.bf16.msra.mxu0 0
    %2484 = vmatprep.mubr.bf16.mxu0 0
    %2485 = vmatmul.mubr.bf16.gmra.mrb[0].mxu0 %v2450
    %v2486 = vpop.f32.mrb[0].mxu0
    %v2487 = vadd.f32 0.0, %v2486
    %v2488 = vpop.f32.mrb[0].mxu0
    %v2489 = vpop.f32.mrb[0].mxu0
    %v2490 = vpop.f32.mrb[0].mxu0
    %2491 = vdwg.mxu0
    %v2493 = vsel %vm811, %v2362, 0
    %2495 = vmatprep.subr.bf16.mxu0 0
    %2496 = vmatpush1.bf16.msra.mxu0 %v1379
    %2497 = vmatprep.subr.bf16.mxu0 0
    %2498 = vmatpush1.bf16.msra.mxu0 0
    %2499 = vmatprep.subr.bf16.mxu0 0
    %2500 = vmatpush1.bf16.msra.mxu0 0
    %2501 = vmatprep.subr.bf16.mxu0 0
    %2502 = vmatpush1.bf16.msra.mxu0 0
    %2503 = vmatprep.subr.bf16.mxu0 0
    %2504 = vmatpush1.bf16.msra.mxu0 0
    %2505 = vmatprep.subr.bf16.mxu0 0
    %2506 = vmatpush1.bf16.msra.mxu0 0
    %2507 = vmatprep.subr.bf16.mxu0 0
    %2508 = vmatpush1.bf16.msra.mxu0 0
    %2509 = vmatprep.subr.bf16.mxu0 0
    %2510 = vmatpush1.bf16.msra.mxu0 0
    %2511 = vmatprep.subr.bf16.mxu0 0
    %2512 = vmatpush1.bf16.msra.mxu0 0
    %2513 = vmatprep.subr.bf16.mxu0 0
    %2514 = vmatpush1.bf16.msra.mxu0 0
    %2515 = vmatprep.subr.bf16.mxu0 0
    %2516 = vmatpush1.bf16.msra.mxu0 0
    %2517 = vmatprep.subr.bf16.mxu0 0
    %2518 = vmatpush1.bf16.msra.mxu0 0
    %2519 = vmatprep.subr.bf16.mxu0 0
    %2520 = vmatpush1.bf16.msra.mxu0 0
    %2521 = vmatprep.subr.bf16.mxu0 0
    %2522 = vmatpush1.bf16.msra.mxu0 0
    %2523 = vmatprep.subr.bf16.mxu0 0
    %2524 = vmatpush1.bf16.msra.mxu0 0
    %2525 = vmatprep.subr.bf16.mxu0 0
    %2526 = vmatpush1.bf16.msra.mxu0 0
    %2527 = vmatprep.mubr.bf16.mxu0 0
    %2528 = vmatmul.mubr.bf16.gmra.mrb[0].mxu0 %v2493
    %v2529 = vpop.f32.mrb[0].mxu0
    %v2530 = vadd.f32 0.0, %v2529
    %v2531 = vpop.f32.mrb[0].mxu0
    %v2532 = vpop.f32.mrb[0].mxu0
    %v2533 = vpop.f32.mrb[0].mxu0
    %2534 = vdwg.mxu0
    %v2535 = vsel %vm139, %v2401, 0.0
    %v2536 = vsel %vm139, %v2444, 0.0
    %v2537 = vadd.f32 %v2535, %v2536
    %v2538 = vsel %vm139, %v2487, 0.0
    %v2539 = vadd.f32 %v2537, %v2538
    %v2540 = vsel %vm139, %v2530, 0.0
    %v2541 = vadd.f32 %v2539, %v2540
    %v2542 = vadd.f32 %v2541, %v1432
    %s2543 = scalar_lea.vmem [#allocation2], 8
    %2544 = vst.msk [vmem:[%s2543] sm:$0xff] %vm139, %v2542
    %v2545 = vsel %vm811, %v2163, 0.0
    %v2546 = vsel %vm811, %v2164, 0.0
    %v2547 = vadd.f32 %v2545, %v2546
    %v2548 = vsel %vm811, %v2165, 0.0
    %v2549 = vadd.f32 %v2547, %v2548
    %v2550 = vsel %vm811, %v2166, 0.0
    %v2551 = vadd.f32 %v2549, %v2550
    %v2552 = vmul.f32 %v2551, %v1443
    %s2553 = scalar_lea.vmem [#allocation4], 8
    %2554 = vst.msk [vmem:[%s2553] sm:$0xff] %vm811, %v2552
    // Predicated region
    $region38: #{tpu_custom_call.1} parent=1 // pred_check
      _
    $region39: #{tpu_custom_call.1} parent=1 // pred_check_branch
      %2556 = sbr.rel (0) target = $region41
    $region40: #{tpu_custom_call.1} parent=1 // pred_region
      %s2558 = ssub.s32 256, 256
      %2559 = vsyncadd [#allocation3], %s2558
      %s2560 = sshll.u32 [#allocation2], 4
      %s2561 = int_to_ptr.vmem [resolvable:$true] %s2560
      %2566 = dma.vmem_to_hbm [thread:$0]  %s2561, 256, %s9, [#allocation3], 128, 128, 8
    $region41: #{tpu_custom_call.1} parent=1 // pred_fallthru
      _
    // Predicated region
    $region42: #{tpu_custom_call.1} parent=1 // pred_check
      _
    $region43: #{tpu_custom_call.1} parent=1 // pred_check_branch
      %2568 = sbr.rel (0) target = $region45
    $region44: #{tpu_custom_call.1} parent=1 // pred_region
      %s2570 = ssub.s32 256, 256
      %2571 = vsyncadd [#allocation5], %s2570
      %s2572 = sshll.u32 [#allocation4], 4
      %s2573 = int_to_ptr.vmem [resolvable:$true] %s2572
      %2578 = dma.vmem_to_hbm [thread:$0]  %s2573, 256, %s10, [#allocation5], 128, 128, 8
    $region45: #{tpu_custom_call.1} parent=1 // pred_fallthru
      _
    // Predicated region
    $region46: #{tpu_custom_call.1} parent=1 // pred_check
      _
    $region47: #{tpu_custom_call.1} parent=1 // pred_check_branch
      %2580 = sbr.rel (0) target = $region49
    $region48: #{tpu_custom_call.1} parent=1 // pred_region
      %2581 = dma.done [#allocation3], 256
    $region49: #{tpu_custom_call.1} parent=1 // pred_fallthru
      _
    // Predicated region
    $region50: #{tpu_custom_call.1} parent=1 // pred_check
      _
    $region51: #{tpu_custom_call.1} parent=1 // pred_check_branch
      %2583 = sbr.rel (0) target = $region53
    $region52: #{tpu_custom_call.1} parent=1 // pred_region
      %2584 = dma.done [#allocation5], 256
    $region53: #{tpu_custom_call.1} parent=1 // pred_fallthru
      _
    %2585 = vsyncpa [#allocation3], 1
    %2586 = vsyncpa [#allocation5], 1

</llo_original>
